<compile_context>
chip_gen: v7x
topology: tpu7x:2x2x1
jax: 0.10.0
libtpu: 0.0.40
codegen_flags: <defaults>
</compile_context>

<pallas_src>
import jax
import jax.numpy as jnp
from jax.experimental import pallas as pl
from jax.experimental.pallas import tpu as pltpu


def _hardswish(x):
    # x * relu6(x + 3) / 6  (PyTorch nn.Hardswish)
    return x * jnp.clip(x + 3.0, 0.0, 6.0) * (1.0 / 6.0)


def actor_sac_kernel(state_ref,                        # (T, D, Bm)  time-major, batch on lanes
                     wih_ref, whh_ref, blstm_ref,      # (4H, D), (4H, H), (4H, 1)
                     w1_ref, b1_ref,                   # (mid, T*H), (mid, 1)
                     w2_ref, b2_ref,                   # (mid, mid), (mid, 1)
                     w3_ref, b3_ref,                   # (mid, mid), (mid, 1)
                     wavg_ref, bavg_ref,               # (out_pad, mid), (out_pad, 1)
                     out_ref,                          # (out_pad, Bm)
                     hs_ref):                          # VMEM scratch (T*H, Bm) f32
    T = state_ref.shape[0]
    Bm = state_ref.shape[2]
    H = whh_ref.shape[1]

    wih = wih_ref[...]
    whh = whh_ref[...]
    bl = blstm_ref[...]                                # (4H, 1), broadcast over lanes

    # sigmoid(x) = 0.5 * tanh(x / 2) + 0.5  -> one tanh pass covers all four gates.
    # Gate row order is the PyTorch LSTM order [i; f; g; o]; only g keeps scale 1.
    row = jax.lax.broadcasted_iota(jnp.int32, (4 * H, 1), 0)
    pre = jnp.where((row >= 2 * H) & (row < 3 * H), 1.0, 0.5)

    hT = jnp.zeros((H, Bm), jnp.float32)
    cT = jnp.zeros((H, Bm), jnp.float32)
    for t in range(T):                                 # T is static -> fully unrolled
        # Per-step input projection: (4H, D) @ (D, Bm) — lane-dense output (N = Bm)
        # and independent of hT, so the scheduler overlaps it with the previous
        # step's elementwise tail.  LSTM math stays f32 (tiny, accuracy-critical).
        gates = (jnp.dot(wih, state_ref[t], preferred_element_type=jnp.float32) + bl
                 + jnp.dot(whh, hT, preferred_element_type=jnp.float32))
        th = jnp.tanh(gates * pre)                     # single EUP pass per step
        i = 0.5 * th[0 * H:1 * H] + 0.5
        f = 0.5 * th[1 * H:2 * H] + 0.5
        g = th[2 * H:3 * H]
        o = 0.5 * th[3 * H:4 * H] + 0.5
        cT = f * cT + i * g
        hT = o * jnp.tanh(cT)
        hs_ref[t * H:(t + 1) * H, :] = hT              # flatten(lstm_out), transposed

    # net_state MLP + mean head, all batch-on-lanes: W @ x with full-lane (Bm)
    # outputs.  MXU operands follow the weight dtype (store the MLP weights as bf16
    # at production mid_dim on v6e/v7x); accumulation is always f32.
    def linear(w_ref, b_ref, x):
        return (jnp.dot(w_ref[...], x.astype(w_ref.dtype),
                        preferred_element_type=jnp.float32) + b_ref[...])

    x0 = hs_ref[...]                                   # (T*H, Bm)
    h1 = jnp.maximum(linear(w1_ref, b1_ref, x0), 0.0)  # ReLU
    h2 = _hardswish(linear(w2_ref, b2_ref, h1))
    h3 = _hardswish(linear(w3_ref, b3_ref, h2))
    out_ref[...] = jnp.tanh(linear(wavg_ref, bavg_ref, h3))


def _pick_batch_block(B, T, D, batch_block, state_block_budget=8 * 2**20):
    """Batch rows per grid block.

    Must be a multiple of 128 (the batch sits on the lane axis) that divides B,
    or the whole batch.  Prefers >= 2 blocks so the 'parallel' grid axis can shard
    across v7x's two TensorCores, and caps the double-buffered f32 state block at
    `state_block_budget` bytes.
    """
    if B < 256 or B % 128 != 0:
        return B
    bytes_per_row = T * D * 4 * 2                      # f32, double-buffered
    cap = max(128, (state_block_budget // bytes_per_row) // 128 * 128)
    bm = max(128, min(batch_block, B // 2, cap) // 128 * 128)
    while bm > 128 and B % bm != 0:
        bm -= 128
    return bm if B % bm == 0 else B


def actor_sac_forward(state, params, *, seq_len, hidden, action_dim,
                      batch_block=512, vmem_limit_bytes=None):
    B, T, D = state.shape
    H = hidden
    assert T == seq_len
    assert params["wih"].shape[1] == D
    assert params["w1"].shape[1] == T * H, (
        "flatten(lstm_out) dim must match net_state input dim (state_dim == seq_len*8)")
    out_pad = params["wavg"].shape[0]
    assert action_dim <= out_pad

    bm = _pick_batch_block(B, T, D, batch_block)
    assert B % bm == 0

    # Batch-on-lanes layout: (B, T, D) -> (T, D, B).  Wrapper-side layout plumbing so
    # the kernel's per-step x_t slice is contiguous and the batch is the lane axis.
    state_tdb = jnp.transpose(state, (1, 2, 0))

    weight_args = (params["wih"], params["whh"], params["blstm"],
                   params["w1"], params["b1"],
                   params["w2"], params["b2"],
                   params["w3"], params["b3"],
                   params["wavg"], params["bavg"])

    in_specs = ([pl.BlockSpec((T, D, bm), lambda i: (0, 0, i))]
                + [pl.BlockSpec(w.shape, lambda i: (0, 0)) for w in weight_args])
    out_specs = pl.BlockSpec((out_pad, bm), lambda i: (0, i))

    cp_kwargs = dict(dimension_semantics=("parallel",))
    if vmem_limit_bytes is not None:                   # set at very large mid_dim / blocks
        cp_kwargs["vmem_limit_bytes"] = int(vmem_limit_bytes)

    out_t = pl.pallas_call(
        actor_sac_kernel,
        out_shape=jax.ShapeDtypeStruct((out_pad, B), jnp.float32),
        grid=(B // bm,),
        in_specs=in_specs,
        out_specs=out_specs,
        scratch_shapes=[pltpu.VMEM((T * H, bm), jnp.float32)],
        compiler_params=pltpu.CompilerParams(**cp_kwargs),
    )(state_tdb, *weight_args)

    return out_t[:action_dim, :].T                     # (B, action_dim)


def init_params(key, state_dim, mid_dim, action_dim, lstm_hidden=8,
                mlp_dtype=jnp.float32):
    """Deterministic synthetic parameters matching the PyTorch module's shapes.

    All weights are stored in native PyTorch (out_features, in_features) orientation;
    biases are column vectors (out_features, 1).  The mean head is zero-padded to a
    sublane-aligned row count once, here.  `mlp_dtype=bfloat16` stores the MLP/head
    weights in bf16 for native-bf16 MXU throughput (recommended at mid_dim >= 256 on
    v6e/v7x); biases and LSTM weights stay f32.
    """
    ks = jax.random.split(key, 12)

    def lin(kw, kb, fan_in, fan_out, w_scale=None):
        bound = 1.0 / jnp.sqrt(fan_in)
        w = jax.random.uniform(kw, (fan_out, fan_in), jnp.float32, -bound, bound)
        if w_scale is not None:
            w = w * w_scale
        b = jax.random.uniform(kb, (fan_out, 1), jnp.float32, -bound, bound)
        return w, b

    H = lstm_hidden
    # LSTM (gate row order [i; f; g; o], as in PyTorch): weight_ih (4H, D),
    # weight_hh (4H, H); the two bias vectors are folded into one column.
    wih, bih = lin(ks[0], ks[1], state_dim, 4 * H)
    whh, bhh = lin(ks[2], ks[3], H, 4 * H)
    blstm = bih + bhh

    w1, b1 = lin(ks[4], ks[5], state_dim, mid_dim)
    w2, b2 = lin(ks[6], ks[7], mid_dim, mid_dim)
    w3, b3 = lin(ks[8], ks[9], mid_dim, mid_dim)
    # net_a_avg: layer_norm(std=0.01, bias=1e-6) -> small weights, constant bias
    wavg, _ = lin(ks[10], ks[11], mid_dim, action_dim, w_scale=0.01)
    bavg = jnp.full((action_dim, 1), 1e-6, jnp.float32)

    # Pad the mean head rows to a multiple of 8 once (padded rows -> tanh(0)=0,
    # sliced off by the wrapper).
    out_pad = ((action_dim + 7) // 8) * 8
    wavg_p = jnp.zeros((out_pad, mid_dim), jnp.float32).at[:action_dim].set(wavg)
    bavg_p = jnp.zeros((out_pad, 1), jnp.float32).at[:action_dim].set(bavg)

    w1, w2, w3, wavg_p = (w.astype(mlp_dtype) for w in (w1, w2, w3, wavg_p))

    return dict(wih=wih, whh=whh, blstm=blstm,
                w1=w1, b1=b1, w2=w2, b2=b2, w3=w3, b3=b3,
                wavg=wavg_p, bavg=bavg_p)


def reference_forward(state, p, *, seq_len, hidden, action_dim):
    """Pure-JAX reference of the same math (for correctness check)."""
    B = state.shape[0]
    H = hidden
    wih_t = p["wih"].astype(jnp.float32).T             # (D, 4H)
    whh_t = p["whh"].astype(jnp.float32).T             # (H, 4H)
    bl = p["blstm"][:, 0]
    h = jnp.zeros((B, H), jnp.float32)
    c = jnp.zeros((B, H), jnp.float32)
    hs = []
    for t in range(seq_len):
        g = state[:, t, :] @ wih_t + h @ whh_t + bl
        i = jax.nn.sigmoid(g[:, :H])
        f = jax.nn.sigmoid(g[:, H:2 * H])
        gg = jnp.tanh(g[:, 2 * H:3 * H])
        o = jax.nn.sigmoid(g[:, 3 * H:])
        c = f * c + i * gg
        h = o * jnp.tanh(c)
        hs.append(h)
    x = jnp.concatenate(hs, axis=1)                    # (B, T*H)
    h1 = jax.nn.relu(x @ p["w1"].astype(jnp.float32).T + p["b1"][:, 0])
    h2 = _hardswish(h1 @ p["w2"].astype(jnp.float32).T + p["b2"][:, 0])
    h3 = _hardswish(h2 @ p["w3"].astype(jnp.float32).T + p["b3"][:, 0])
    a = jnp.tanh(h3 @ p["wavg"].astype(jnp.float32).T + p["bavg"][:, 0])
    return a[:, :action_dim]


if __name__ == "__main__":
    # Small shapes consistent with the module: LSTM hidden is fixed at 8, and
    # flatten(lstm_out) must match net_state's input dim => state_dim = seq_len * 8.
    B, T, H = 2, 8, 8
    state_dim = T * H          # 64
    mid_dim = 32
    action_dim = 4

    key = jax.random.PRNGKey(0)
    k_state, k_params, k_state2 = jax.random.split(key, 3)

    # --- f32 path, single block (demo shapes) ---------------------------------
    state = jax.random.normal(k_state, (B, T, state_dim), jnp.float32)
    params = init_params(k_params, state_dim, mid_dim, action_dim, lstm_hidden=H)

    out = actor_sac_forward(state, params, seq_len=T, hidden=H, action_dim=action_dim)
    out = jax.block_until_ready(out)
    ref = reference_forward(state, params, seq_len=T, hidden=H, action_dim=action_dim)
    assert out.shape == (B, action_dim)
    assert jnp.allclose(out, ref, atol=1e-5), "f32 Pallas output mismatch vs JAX reference"

    # --- bf16-MXU weights + multi-block grid (exercises both-TC / tiled path) ---
    B2 = 256
    state2 = jax.random.normal(k_state2, (B2, T, state_dim), jnp.float32)
    params_bf16 = init_params(k_params, state_dim, mid_dim, action_dim,
                              lstm_hidden=H, mlp_dtype=jnp.bfloat16)
    out2 = actor_sac_forward(state2, params_bf16, seq_len=T, hidden=H,
                             action_dim=action_dim)
    out2 = jax.block_until_ready(out2)
    ref2 = reference_forward(state2, params_bf16, seq_len=T, hidden=H,
                             action_dim=action_dim)
    assert out2.shape == (B2, action_dim)
    assert jnp.allclose(out2, ref2, atol=3e-2), "bf16 Pallas output mismatch vs JAX reference"

    # TODO(synk): get_action / get_action_logprob sampling paths (torch.normal noise,
    # std head clamp/exp, logprob) are not part of forward() and are not implemented.
    print("KERNEL_OK")
</pallas_src>

<mosaic_0001>
module attributes {stable_mosaic.version = 11 : i64} {
  func.func @actor_sac_kernel(%arg0: i32, %arg1: memref<8x64x2xf32, #tpu.memory_space<vmem>>, %arg2: memref<32x64xf32, #tpu.memory_space<vmem>>, %arg3: memref<32x8xf32, #tpu.memory_space<vmem>>, %arg4: memref<32x1xf32, #tpu.memory_space<vmem>>, %arg5: memref<32x64xf32, #tpu.memory_space<vmem>>, %arg6: memref<32x1xf32, #tpu.memory_space<vmem>>, %arg7: memref<32x32xf32, #tpu.memory_space<vmem>>, %arg8: memref<32x1xf32, #tpu.memory_space<vmem>>, %arg9: memref<32x32xf32, #tpu.memory_space<vmem>>, %arg10: memref<32x1xf32, #tpu.memory_space<vmem>>, %arg11: memref<8x32xf32, #tpu.memory_space<vmem>>, %arg12: memref<8x1xf32, #tpu.memory_space<vmem>>, %arg13: memref<8x2xf32, #tpu.memory_space<vmem>>, %arg14: memref<64x2xf32, #tpu.memory_space<vmem>>) attributes {dimension_semantics = [#tpu.dimension_semantics<parallel>], iteration_bounds = array<i64: 1>, scalar_prefetch = 0 : i64, scratch_operands = 1 : i64, tpu.core_type = #tpu.core_type<tc>, window_params = [{transform_indices = @transform_0, window_bounds = array<i64: 8, 64, 2>}, {pipeline_mode = #tpu.pipeline_mode<synchronous>, transform_indices = @transform_1, window_bounds = array<i64: 32, 64>}, {pipeline_mode = #tpu.pipeline_mode<synchronous>, transform_indices = @transform_2, window_bounds = array<i64: 32, 8>}, {pipeline_mode = #tpu.pipeline_mode<synchronous>, transform_indices = @transform_3, window_bounds = array<i64: 32, 1>}, {pipeline_mode = #tpu.pipeline_mode<synchronous>, transform_indices = @transform_4, window_bounds = array<i64: 32, 64>}, {pipeline_mode = #tpu.pipeline_mode<synchronous>, transform_indices = @transform_5, window_bounds = array<i64: 32, 1>}, {pipeline_mode = #tpu.pipeline_mode<synchronous>, transform_indices = @transform_6, window_bounds = array<i64: 32, 32>}, {pipeline_mode = #tpu.pipeline_mode<synchronous>, transform_indices = @transform_7, window_bounds = array<i64: 32, 1>}, {pipeline_mode = #tpu.pipeline_mode<synchronous>, transform_indices = @transform_8, window_bounds = array<i64: 32, 32>}, {pipeline_mode = #tpu.pipeline_mode<synchronous>, transform_indices = @transform_9, window_bounds = array<i64: 32, 1>}, {pipeline_mode = #tpu.pipeline_mode<synchronous>, transform_indices = @transform_10, window_bounds = array<i64: 8, 32>}, {pipeline_mode = #tpu.pipeline_mode<synchronous>, transform_indices = @transform_11, window_bounds = array<i64: 8, 1>}, {transform_indices = @transform_12, window_bounds = array<i64: 8, 2>}]} {
    %c0 = arith.constant 0 : index
    %c0_0 = arith.constant 0 : index
    %0 = vector.load %arg2[%c0, %c0_0] : memref<32x64xf32, #tpu.memory_space<vmem>>, vector<32x64xf32>
    %c0_1 = arith.constant 0 : index
    %c0_2 = arith.constant 0 : index
    %1 = vector.load %arg3[%c0_1, %c0_2] : memref<32x8xf32, #tpu.memory_space<vmem>>, vector<32x8xf32>
    %c0_3 = arith.constant 0 : index
    %c0_4 = arith.constant 0 : index
    %2 = vector.load %arg4[%c0_3, %c0_4] : memref<32x1xf32, #tpu.memory_space<vmem>>, vector<32x1xf32>
    %3 = tpu.iota {dimensions = array<i32: 0>} : vector<32x1xi32>
    %c16_i32 = arith.constant 16 : i32
    %4 = vector.broadcast %c16_i32 : i32 to vector<32x1xi32>
    %5 = arith.cmpi sge, %3, %4 : vector<32x1xi32>
    %c24_i32 = arith.constant 24 : i32
    %6 = vector.broadcast %c24_i32 : i32 to vector<32x1xi32>
    %7 = arith.cmpi slt, %3, %6 : vector<32x1xi32>
    %8 = arith.andi %5, %7 : vector<32x1xi1>
    %cst = arith.constant 1.000000e+00 : f32
    %cst_5 = arith.constant 5.000000e-01 : f32
    %9 = vector.broadcast %cst : f32 to vector<32x1xf32>
    %10 = vector.broadcast %cst_5 : f32 to vector<32x1xf32>
    %11 = arith.select %8, %9, %10 : vector<32x1xi1>, vector<32x1xf32>
    %cst_6 = arith.constant 0.000000e+00 : f32
    %12 = vector.broadcast %cst_6 : f32 to vector<8x2xf32>
    %cst_7 = arith.constant 0.000000e+00 : f32
    %13 = vector.broadcast %cst_7 : f32 to vector<8x2xf32>
    %c0_8 = arith.constant 0 : index
    %c0_9 = arith.constant 0 : index
    %c0_10 = arith.constant 0 : index
    %14 = vector.load %arg1[%c0_8, %c0_9, %c0_10] : memref<8x64x2xf32, #tpu.memory_space<vmem>>, vector<1x64x2xf32>
    %15 = vector.shape_cast %14 : vector<1x64x2xf32> to vector<64x2xf32>
    %cst_11 = arith.constant dense<0.000000e+00> : vector<32x2xf32>
    %16 = tpu.matmul %0, %15, %cst_11 {dimension_numbers = #tpu.dot_dimension_numbers<[1], [0], [0], [1], [0, 0, 1, 1], [], []>} : vector<32x64xf32>, vector<64x2xf32>, vector<32x2xf32> -> vector<32x2xf32>
    %17 = vector.broadcast %2 : vector<32x1xf32> to vector<32x2xf32>
    %18 = arith.addf %16, %17 : vector<32x2xf32>
    %cst_12 = arith.constant dense<0.000000e+00> : vector<32x2xf32>
    %19 = tpu.matmul %1, %12, %cst_12 {dimension_numbers = #tpu.dot_dimension_numbers<[1], [0], [0], [1], [0, 0, 1, 1], [], []>} : vector<32x8xf32>, vector<8x2xf32>, vector<32x2xf32> -> vector<32x2xf32>
    %20 = arith.addf %18, %19 : vector<32x2xf32>
    %21 = vector.broadcast %11 : vector<32x1xf32> to vector<32x2xf32>
    %22 = arith.mulf %20, %21 : vector<32x2xf32>
    %23 = math.tanh %22 : vector<32x2xf32>
    %24 = vector.extract_strided_slice %23 {offsets = [0, 0], sizes = [8, 2], strides = [1, 1]} : vector<32x2xf32> to vector<8x2xf32>
    %cst_13 = arith.constant 5.000000e-01 : f32
    %25 = vector.broadcast %cst_13 : f32 to vector<8x2xf32>
    %26 = arith.mulf %25, %24 : vector<8x2xf32>
    %cst_14 = arith.constant 5.000000e-01 : f32
    %27 = vector.broadcast %cst_14 : f32 to vector<8x2xf32>
    %28 = arith.addf %26, %27 : vector<8x2xf32>
    %29 = vector.extract_strided_slice %23 {offsets = [8, 0], sizes = [8, 2], strides = [1, 1]} : vector<32x2xf32> to vector<8x2xf32>
    %cst_15 = arith.constant 5.000000e-01 : f32
    %30 = vector.broadcast %cst_15 : f32 to vector<8x2xf32>
    %31 = arith.mulf %30, %29 : vector<8x2xf32>
    %cst_16 = arith.constant 5.000000e-01 : f32
    %32 = vector.broadcast %cst_16 : f32 to vector<8x2xf32>
    %33 = arith.addf %31, %32 : vector<8x2xf32>
    %34 = vector.extract_strided_slice %23 {offsets = [16, 0], sizes = [8, 2], strides = [1, 1]} : vector<32x2xf32> to vector<8x2xf32>
    %35 = vector.extract_strided_slice %23 {offsets = [24, 0], sizes = [8, 2], strides = [1, 1]} : vector<32x2xf32> to vector<8x2xf32>
    %cst_17 = arith.constant 5.000000e-01 : f32
    %36 = vector.broadcast %cst_17 : f32 to vector<8x2xf32>
    %37 = arith.mulf %36, %35 : vector<8x2xf32>
    %cst_18 = arith.constant 5.000000e-01 : f32
    %38 = vector.broadcast %cst_18 : f32 to vector<8x2xf32>
    %39 = arith.addf %37, %38 : vector<8x2xf32>
    %40 = arith.mulf %33, %13 : vector<8x2xf32>
    %41 = arith.mulf %28, %34 : vector<8x2xf32>
    %42 = arith.addf %40, %41 : vector<8x2xf32>
    %43 = math.tanh %42 : vector<8x2xf32>
    %44 = arith.mulf %39, %43 : vector<8x2xf32>
    %c0_19 = arith.constant 0 : index
    %c0_20 = arith.constant 0 : index
    %45 = vector.load %arg14[%c0_19, %c0_20] : memref<64x2xf32, #tpu.memory_space<vmem>>, vector<8x2xf32>
    tpu.vector_store %arg14[%c0_19, %c0_20], %44 {strides = array<i32>} : memref<64x2xf32, #tpu.memory_space<vmem>>, vector<8x2xf32>,
    %c1 = arith.constant 1 : index
    %c0_21 = arith.constant 0 : index
    %c0_22 = arith.constant 0 : index
    %46 = vector.load %arg1[%c1, %c0_21, %c0_22] : memref<8x64x2xf32, #tpu.memory_space<vmem>>, vector<1x64x2xf32>
    %47 = vector.shape_cast %46 : vector<1x64x2xf32> to vector<64x2xf32>
    %cst_23 = arith.constant dense<0.000000e+00> : vector<32x2xf32>
    %48 = tpu.matmul %0, %47, %cst_23 {dimension_numbers = #tpu.dot_dimension_numbers<[1], [0], [0], [1], [0, 0, 1, 1], [], []>} : vector<32x64xf32>, vector<64x2xf32>, vector<32x2xf32> -> vector<32x2xf32>
    %49 = vector.broadcast %2 : vector<32x1xf32> to vector<32x2xf32>
    %50 = arith.addf %48, %49 : vector<32x2xf32>
    %cst_24 = arith.constant dense<0.000000e+00> : vector<32x2xf32>
    %51 = tpu.matmul %1, %44, %cst_24 {dimension_numbers = #tpu.dot_dimension_numbers<[1], [0], [0], [1], [0, 0, 1, 1], [], []>} : vector<32x8xf32>, vector<8x2xf32>, vector<32x2xf32> -> vector<32x2xf32>
    %52 = arith.addf %50, %51 : vector<32x2xf32>
    %53 = vector.broadcast %11 : vector<32x1xf32> to vector<32x2xf32>
    %54 = arith.mulf %52, %53 : vector<32x2xf32>
    %55 = math.tanh %54 : vector<32x2xf32>
    %56 = vector.extract_strided_slice %55 {offsets = [0, 0], sizes = [8, 2], strides = [1, 1]} : vector<32x2xf32> to vector<8x2xf32>
    %cst_25 = arith.constant 5.000000e-01 : f32
    %57 = vector.broadcast %cst_25 : f32 to vector<8x2xf32>
    %58 = arith.mulf %57, %56 : vector<8x2xf32>
    %cst_26 = arith.constant 5.000000e-01 : f32
    %59 = vector.broadcast %cst_26 : f32 to vector<8x2xf32>
    %60 = arith.addf %58, %59 : vector<8x2xf32>
    %61 = vector.extract_strided_slice %55 {offsets = [8, 0], sizes = [8, 2], strides = [1, 1]} : vector<32x2xf32> to vector<8x2xf32>
    %cst_27 = arith.constant 5.000000e-01 : f32
    %62 = vector.broadcast %cst_27 : f32 to vector<8x2xf32>
    %63 = arith.mulf %62, %61 : vector<8x2xf32>
    %cst_28 = arith.constant 5.000000e-01 : f32
    %64 = vector.broadcast %cst_28 : f32 to vector<8x2xf32>
    %65 = arith.addf %63, %64 : vector<8x2xf32>
    %66 = vector.extract_strided_slice %55 {offsets = [16, 0], sizes = [8, 2], strides = [1, 1]} : vector<32x2xf32> to vector<8x2xf32>
    %67 = vector.extract_strided_slice %55 {offsets = [24, 0], sizes = [8, 2], strides = [1, 1]} : vector<32x2xf32> to vector<8x2xf32>
    %cst_29 = arith.constant 5.000000e-01 : f32
    %68 = vector.broadcast %cst_29 : f32 to vector<8x2xf32>
    %69 = arith.mulf %68, %67 : vector<8x2xf32>
    %cst_30 = arith.constant 5.000000e-01 : f32
    %70 = vector.broadcast %cst_30 : f32 to vector<8x2xf32>
    %71 = arith.addf %69, %70 : vector<8x2xf32>
    %72 = arith.mulf %65, %42 : vector<8x2xf32>
    %73 = arith.mulf %60, %66 : vector<8x2xf32>
    %74 = arith.addf %72, %73 : vector<8x2xf32>
    %75 = math.tanh %74 : vector<8x2xf32>
    %76 = arith.mulf %71, %75 : vector<8x2xf32>
    %c8 = arith.constant 8 : index
    %c0_31 = arith.constant 0 : index
    %77 = vector.load %arg14[%c8, %c0_31] : memref<64x2xf32, #tpu.memory_space<vmem>>, vector<8x2xf32>
    tpu.vector_store %arg14[%c8, %c0_31], %76 {strides = array<i32>} : memref<64x2xf32, #tpu.memory_space<vmem>>, vector<8x2xf32>,
    %c2 = arith.constant 2 : index
    %c0_32 = arith.constant 0 : index
    %c0_33 = arith.constant 0 : index
    %78 = vector.load %arg1[%c2, %c0_32, %c0_33] : memref<8x64x2xf32, #tpu.memory_space<vmem>>, vector<1x64x2xf32>
    %79 = vector.shape_cast %78 : vector<1x64x2xf32> to vector<64x2xf32>
    %cst_34 = arith.constant dense<0.000000e+00> : vector<32x2xf32>
    %80 = tpu.matmul %0, %79, %cst_34 {dimension_numbers = #tpu.dot_dimension_numbers<[1], [0], [0], [1], [0, 0, 1, 1], [], []>} : vector<32x64xf32>, vector<64x2xf32>, vector<32x2xf32> -> vector<32x2xf32>
    %81 = vector.broadcast %2 : vector<32x1xf32> to vector<32x2xf32>
    %82 = arith.addf %80, %81 : vector<32x2xf32>
    %cst_35 = arith.constant dense<0.000000e+00> : vector<32x2xf32>
    %83 = tpu.matmul %1, %76, %cst_35 {dimension_numbers = #tpu.dot_dimension_numbers<[1], [0], [0], [1], [0, 0, 1, 1], [], []>} : vector<32x8xf32>, vector<8x2xf32>, vector<32x2xf32> -> vector<32x2xf32>
    %84 = arith.addf %82, %83 : vector<32x2xf32>
    %85 = vector.broadcast %11 : vector<32x1xf32> to vector<32x2xf32>
    %86 = arith.mulf %84, %85 : vector<32x2xf32>
    %87 = math.tanh %86 : vector<32x2xf32>
    %88 = vector.extract_strided_slice %87 {offsets = [0, 0], sizes = [8, 2], strides = [1, 1]} : vector<32x2xf32> to vector<8x2xf32>
    %cst_36 = arith.constant 5.000000e-01 : f32
    %89 = vector.broadcast %cst_36 : f32 to vector<8x2xf32>
    %90 = arith.mulf %89, %88 : vector<8x2xf32>
    %cst_37 = arith.constant 5.000000e-01 : f32
    %91 = vector.broadcast %cst_37 : f32 to vector<8x2xf32>
    %92 = arith.addf %90, %91 : vector<8x2xf32>
    %93 = vector.extract_strided_slice %87 {offsets = [8, 0], sizes = [8, 2], strides = [1, 1]} : vector<32x2xf32> to vector<8x2xf32>
    %cst_38 = arith.constant 5.000000e-01 : f32
    %94 = vector.broadcast %cst_38 : f32 to vector<8x2xf32>
    %95 = arith.mulf %94, %93 : vector<8x2xf32>
    %cst_39 = arith.constant 5.000000e-01 : f32
    %96 = vector.broadcast %cst_39 : f32 to vector<8x2xf32>
    %97 = arith.addf %95, %96 : vector<8x2xf32>
    %98 = vector.extract_strided_slice %87 {offsets = [16, 0], sizes = [8, 2], strides = [1, 1]} : vector<32x2xf32> to vector<8x2xf32>
    %99 = vector.extract_strided_slice %87 {offsets = [24, 0], sizes = [8, 2], strides = [1, 1]} : vector<32x2xf32> to vector<8x2xf32>
    %cst_40 = arith.constant 5.000000e-01 : f32
    %100 = vector.broadcast %cst_40 : f32 to vector<8x2xf32>
    %101 = arith.mulf %100, %99 : vector<8x2xf32>
    %cst_41 = arith.constant 5.000000e-01 : f32
    %102 = vector.broadcast %cst_41 : f32 to vector<8x2xf32>
    %103 = arith.addf %101, %102 : vector<8x2xf32>
    %104 = arith.mulf %97, %74 : vector<8x2xf32>
    %105 = arith.mulf %92, %98 : vector<8x2xf32>
    %106 = arith.addf %104, %105 : vector<8x2xf32>
    %107 = math.tanh %106 : vector<8x2xf32>
    %108 = arith.mulf %103, %107 : vector<8x2xf32>
    %c16 = arith.constant 16 : index
    %c0_42 = arith.constant 0 : index
    %109 = vector.load %arg14[%c16, %c0_42] : memref<64x2xf32, #tpu.memory_space<vmem>>, vector<8x2xf32>
    tpu.vector_store %arg14[%c16, %c0_42], %108 {strides = array<i32>} : memref<64x2xf32, #tpu.memory_space<vmem>>, vector<8x2xf32>,
    %c3 = arith.constant 3 : index
    %c0_43 = arith.constant 0 : index
    %c0_44 = arith.constant 0 : index
    %110 = vector.load %arg1[%c3, %c0_43, %c0_44] : memref<8x64x2xf32, #tpu.memory_space<vmem>>, vector<1x64x2xf32>
    %111 = vector.shape_cast %110 : vector<1x64x2xf32> to vector<64x2xf32>
    %cst_45 = arith.constant dense<0.000000e+00> : vector<32x2xf32>
    %112 = tpu.matmul %0, %111, %cst_45 {dimension_numbers = #tpu.dot_dimension_numbers<[1], [0], [0], [1], [0, 0, 1, 1], [], []>} : vector<32x64xf32>, vector<64x2xf32>, vector<32x2xf32> -> vector<32x2xf32>
    %113 = vector.broadcast %2 : vector<32x1xf32> to vector<32x2xf32>
    %114 = arith.addf %112, %113 : vector<32x2xf32>
    %cst_46 = arith.constant dense<0.000000e+00> : vector<32x2xf32>
    %115 = tpu.matmul %1, %108, %cst_46 {dimension_numbers = #tpu.dot_dimension_numbers<[1], [0], [0], [1], [0, 0, 1, 1], [], []>} : vector<32x8xf32>, vector<8x2xf32>, vector<32x2xf32> -> vector<32x2xf32>
    %116 = arith.addf %114, %115 : vector<32x2xf32>
    %117 = vector.broadcast %11 : vector<32x1xf32> to vector<32x2xf32>
    %118 = arith.mulf %116, %117 : vector<32x2xf32>
    %119 = math.tanh %118 : vector<32x2xf32>
    %120 = vector.extract_strided_slice %119 {offsets = [0, 0], sizes = [8, 2], strides = [1, 1]} : vector<32x2xf32> to vector<8x2xf32>
    %cst_47 = arith.constant 5.000000e-01 : f32
    %121 = vector.broadcast %cst_47 : f32 to vector<8x2xf32>
    %122 = arith.mulf %121, %120 : vector<8x2xf32>
    %cst_48 = arith.constant 5.000000e-01 : f32
    %123 = vector.broadcast %cst_48 : f32 to vector<8x2xf32>
    %124 = arith.addf %122, %123 : vector<8x2xf32>
    %125 = vector.extract_strided_slice %119 {offsets = [8, 0], sizes = [8, 2], strides = [1, 1]} : vector<32x2xf32> to vector<8x2xf32>
    %cst_49 = arith.constant 5.000000e-01 : f32
    %126 = vector.broadcast %cst_49 : f32 to vector<8x2xf32>
    %127 = arith.mulf %126, %125 : vector<8x2xf32>
    %cst_50 = arith.constant 5.000000e-01 : f32
    %128 = vector.broadcast %cst_50 : f32 to vector<8x2xf32>
    %129 = arith.addf %127, %128 : vector<8x2xf32>
    %130 = vector.extract_strided_slice %119 {offsets = [16, 0], sizes = [8, 2], strides = [1, 1]} : vector<32x2xf32> to vector<8x2xf32>
    %131 = vector.extract_strided_slice %119 {offsets = [24, 0], sizes = [8, 2], strides = [1, 1]} : vector<32x2xf32> to vector<8x2xf32>
    %cst_51 = arith.constant 5.000000e-01 : f32
    %132 = vector.broadcast %cst_51 : f32 to vector<8x2xf32>
    %133 = arith.mulf %132, %131 : vector<8x2xf32>
    %cst_52 = arith.constant 5.000000e-01 : f32
    %134 = vector.broadcast %cst_52 : f32 to vector<8x2xf32>
    %135 = arith.addf %133, %134 : vector<8x2xf32>
    %136 = arith.mulf %129, %106 : vector<8x2xf32>
    %137 = arith.mulf %124, %130 : vector<8x2xf32>
    %138 = arith.addf %136, %137 : vector<8x2xf32>
    %139 = math.tanh %138 : vector<8x2xf32>
    %140 = arith.mulf %135, %139 : vector<8x2xf32>
    %c24 = arith.constant 24 : index
    %c0_53 = arith.constant 0 : index
    %141 = vector.load %arg14[%c24, %c0_53] : memref<64x2xf32, #tpu.memory_space<vmem>>, vector<8x2xf32>
    tpu.vector_store %arg14[%c24, %c0_53], %140 {strides = array<i32>} : memref<64x2xf32, #tpu.memory_space<vmem>>, vector<8x2xf32>,
    %c4 = arith.constant 4 : index
    %c0_54 = arith.constant 0 : index
    %c0_55 = arith.constant 0 : index
    %142 = vector.load %arg1[%c4, %c0_54, %c0_55] : memref<8x64x2xf32, #tpu.memory_space<vmem>>, vector<1x64x2xf32>
    %143 = vector.shape_cast %142 : vector<1x64x2xf32> to vector<64x2xf32>
    %cst_56 = arith.constant dense<0.000000e+00> : vector<32x2xf32>
    %144 = tpu.matmul %0, %143, %cst_56 {dimension_numbers = #tpu.dot_dimension_numbers<[1], [0], [0], [1], [0, 0, 1, 1], [], []>} : vector<32x64xf32>, vector<64x2xf32>, vector<32x2xf32> -> vector<32x2xf32>
    %145 = vector.broadcast %2 : vector<32x1xf32> to vector<32x2xf32>
    %146 = arith.addf %144, %145 : vector<32x2xf32>
    %cst_57 = arith.constant dense<0.000000e+00> : vector<32x2xf32>
    %147 = tpu.matmul %1, %140, %cst_57 {dimension_numbers = #tpu.dot_dimension_numbers<[1], [0], [0], [1], [0, 0, 1, 1], [], []>} : vector<32x8xf32>, vector<8x2xf32>, vector<32x2xf32> -> vector<32x2xf32>
    %148 = arith.addf %146, %147 : vector<32x2xf32>
    %149 = vector.broadcast %11 : vector<32x1xf32> to vector<32x2xf32>
    %150 = arith.mulf %148, %149 : vector<32x2xf32>
    %151 = math.tanh %150 : vector<32x2xf32>
    %152 = vector.extract_strided_slice %151 {offsets = [0, 0], sizes = [8, 2], strides = [1, 1]} : vector<32x2xf32> to vector<8x2xf32>
    %cst_58 = arith.constant 5.000000e-01 : f32
    %153 = vector.broadcast %cst_58 : f32 to vector<8x2xf32>
    %154 = arith.mulf %153, %152 : vector<8x2xf32>
    %cst_59 = arith.constant 5.000000e-01 : f32
    %155 = vector.broadcast %cst_59 : f32 to vector<8x2xf32>
    %156 = arith.addf %154, %155 : vector<8x2xf32>
    %157 = vector.extract_strided_slice %151 {offsets = [8, 0], sizes = [8, 2], strides = [1, 1]} : vector<32x2xf32> to vector<8x2xf32>
    %cst_60 = arith.constant 5.000000e-01 : f32
    %158 = vector.broadcast %cst_60 : f32 to vector<8x2xf32>
    %159 = arith.mulf %158, %157 : vector<8x2xf32>
    %cst_61 = arith.constant 5.000000e-01 : f32
    %160 = vector.broadcast %cst_61 : f32 to vector<8x2xf32>
    %161 = arith.addf %159, %160 : vector<8x2xf32>
    %162 = vector.extract_strided_slice %151 {offsets = [16, 0], sizes = [8, 2], strides = [1, 1]} : vector<32x2xf32> to vector<8x2xf32>
    %163 = vector.extract_strided_slice %151 {offsets = [24, 0], sizes = [8, 2], strides = [1, 1]} : vector<32x2xf32> to vector<8x2xf32>
    %cst_62 = arith.constant 5.000000e-01 : f32
    %164 = vector.broadcast %cst_62 : f32 to vector<8x2xf32>
    %165 = arith.mulf %164, %163 : vector<8x2xf32>
    %cst_63 = arith.constant 5.000000e-01 : f32
    %166 = vector.broadcast %cst_63 : f32 to vector<8x2xf32>
    %167 = arith.addf %165, %166 : vector<8x2xf32>
    %168 = arith.mulf %161, %138 : vector<8x2xf32>
    %169 = arith.mulf %156, %162 : vector<8x2xf32>
    %170 = arith.addf %168, %169 : vector<8x2xf32>
    %171 = math.tanh %170 : vector<8x2xf32>
    %172 = arith.mulf %167, %171 : vector<8x2xf32>
    %c32 = arith.constant 32 : index
    %c0_64 = arith.constant 0 : index
    %173 = vector.load %arg14[%c32, %c0_64] : memref<64x2xf32, #tpu.memory_space<vmem>>, vector<8x2xf32>
    tpu.vector_store %arg14[%c32, %c0_64], %172 {strides = array<i32>} : memref<64x2xf32, #tpu.memory_space<vmem>>, vector<8x2xf32>,
    %c5 = arith.constant 5 : index
    %c0_65 = arith.constant 0 : index
    %c0_66 = arith.constant 0 : index
    %174 = vector.load %arg1[%c5, %c0_65, %c0_66] : memref<8x64x2xf32, #tpu.memory_space<vmem>>, vector<1x64x2xf32>
    %175 = vector.shape_cast %174 : vector<1x64x2xf32> to vector<64x2xf32>
    %cst_67 = arith.constant dense<0.000000e+00> : vector<32x2xf32>
    %176 = tpu.matmul %0, %175, %cst_67 {dimension_numbers = #tpu.dot_dimension_numbers<[1], [0], [0], [1], [0, 0, 1, 1], [], []>} : vector<32x64xf32>, vector<64x2xf32>, vector<32x2xf32> -> vector<32x2xf32>
    %177 = vector.broadcast %2 : vector<32x1xf32> to vector<32x2xf32>
    %178 = arith.addf %176, %177 : vector<32x2xf32>
    %cst_68 = arith.constant dense<0.000000e+00> : vector<32x2xf32>
    %179 = tpu.matmul %1, %172, %cst_68 {dimension_numbers = #tpu.dot_dimension_numbers<[1], [0], [0], [1], [0, 0, 1, 1], [], []>} : vector<32x8xf32>, vector<8x2xf32>, vector<32x2xf32> -> vector<32x2xf32>
    %180 = arith.addf %178, %179 : vector<32x2xf32>
    %181 = vector.broadcast %11 : vector<32x1xf32> to vector<32x2xf32>
    %182 = arith.mulf %180, %181 : vector<32x2xf32>
    %183 = math.tanh %182 : vector<32x2xf32>
    %184 = vector.extract_strided_slice %183 {offsets = [0, 0], sizes = [8, 2], strides = [1, 1]} : vector<32x2xf32> to vector<8x2xf32>
    %cst_69 = arith.constant 5.000000e-01 : f32
    %185 = vector.broadcast %cst_69 : f32 to vector<8x2xf32>
    %186 = arith.mulf %185, %184 : vector<8x2xf32>
    %cst_70 = arith.constant 5.000000e-01 : f32
    %187 = vector.broadcast %cst_70 : f32 to vector<8x2xf32>
    %188 = arith.addf %186, %187 : vector<8x2xf32>
    %189 = vector.extract_strided_slice %183 {offsets = [8, 0], sizes = [8, 2], strides = [1, 1]} : vector<32x2xf32> to vector<8x2xf32>
    %cst_71 = arith.constant 5.000000e-01 : f32
    %190 = vector.broadcast %cst_71 : f32 to vector<8x2xf32>
    %191 = arith.mulf %190, %189 : vector<8x2xf32>
    %cst_72 = arith.constant 5.000000e-01 : f32
    %192 = vector.broadcast %cst_72 : f32 to vector<8x2xf32>
    %193 = arith.addf %191, %192 : vector<8x2xf32>
    %194 = vector.extract_strided_slice %183 {offsets = [16, 0], sizes = [8, 2], strides = [1, 1]} : vector<32x2xf32> to vector<8x2xf32>
    %195 = vector.extract_strided_slice %183 {offsets = [24, 0], sizes = [8, 2], strides = [1, 1]} : vector<32x2xf32> to vector<8x2xf32>
    %cst_73 = arith.constant 5.000000e-01 : f32
    %196 = vector.broadcast %cst_73 : f32 to vector<8x2xf32>
    %197 = arith.mulf %196, %195 : vector<8x2xf32>
    %cst_74 = arith.constant 5.000000e-01 : f32
    %198 = vector.broadcast %cst_74 : f32 to vector<8x2xf32>
    %199 = arith.addf %197, %198 : vector<8x2xf32>
    %200 = arith.mulf %193, %170 : vector<8x2xf32>
    %201 = arith.mulf %188, %194 : vector<8x2xf32>
    %202 = arith.addf %200, %201 : vector<8x2xf32>
    %203 = math.tanh %202 : vector<8x2xf32>
    %204 = arith.mulf %199, %203 : vector<8x2xf32>
    %c40 = arith.constant 40 : index
    %c0_75 = arith.constant 0 : index
    %205 = vector.load %arg14[%c40, %c0_75] : memref<64x2xf32, #tpu.memory_space<vmem>>, vector<8x2xf32>
    tpu.vector_store %arg14[%c40, %c0_75], %204 {strides = array<i32>} : memref<64x2xf32, #tpu.memory_space<vmem>>, vector<8x2xf32>,
    %c6 = arith.constant 6 : index
    %c0_76 = arith.constant 0 : index
    %c0_77 = arith.constant 0 : index
    %206 = vector.load %arg1[%c6, %c0_76, %c0_77] : memref<8x64x2xf32, #tpu.memory_space<vmem>>, vector<1x64x2xf32>
    %207 = vector.shape_cast %206 : vector<1x64x2xf32> to vector<64x2xf32>
    %cst_78 = arith.constant dense<0.000000e+00> : vector<32x2xf32>
    %208 = tpu.matmul %0, %207, %cst_78 {dimension_numbers = #tpu.dot_dimension_numbers<[1], [0], [0], [1], [0, 0, 1, 1], [], []>} : vector<32x64xf32>, vector<64x2xf32>, vector<32x2xf32> -> vector<32x2xf32>
    %209 = vector.broadcast %2 : vector<32x1xf32> to vector<32x2xf32>
    %210 = arith.addf %208, %209 : vector<32x2xf32>
    %cst_79 = arith.constant dense<0.000000e+00> : vector<32x2xf32>
    %211 = tpu.matmul %1, %204, %cst_79 {dimension_numbers = #tpu.dot_dimension_numbers<[1], [0], [0], [1], [0, 0, 1, 1], [], []>} : vector<32x8xf32>, vector<8x2xf32>, vector<32x2xf32> -> vector<32x2xf32>
    %212 = arith.addf %210, %211 : vector<32x2xf32>
    %213 = vector.broadcast %11 : vector<32x1xf32> to vector<32x2xf32>
    %214 = arith.mulf %212, %213 : vector<32x2xf32>
    %215 = math.tanh %214 : vector<32x2xf32>
    %216 = vector.extract_strided_slice %215 {offsets = [0, 0], sizes = [8, 2], strides = [1, 1]} : vector<32x2xf32> to vector<8x2xf32>
    %cst_80 = arith.constant 5.000000e-01 : f32
    %217 = vector.broadcast %cst_80 : f32 to vector<8x2xf32>
    %218 = arith.mulf %217, %216 : vector<8x2xf32>
    %cst_81 = arith.constant 5.000000e-01 : f32
    %219 = vector.broadcast %cst_81 : f32 to vector<8x2xf32>
    %220 = arith.addf %218, %219 : vector<8x2xf32>
    %221 = vector.extract_strided_slice %215 {offsets = [8, 0], sizes = [8, 2], strides = [1, 1]} : vector<32x2xf32> to vector<8x2xf32>
    %cst_82 = arith.constant 5.000000e-01 : f32
    %222 = vector.broadcast %cst_82 : f32 to vector<8x2xf32>
    %223 = arith.mulf %222, %221 : vector<8x2xf32>
    %cst_83 = arith.constant 5.000000e-01 : f32
    %224 = vector.broadcast %cst_83 : f32 to vector<8x2xf32>
    %225 = arith.addf %223, %224 : vector<8x2xf32>
    %226 = vector.extract_strided_slice %215 {offsets = [16, 0], sizes = [8, 2], strides = [1, 1]} : vector<32x2xf32> to vector<8x2xf32>
    %227 = vector.extract_strided_slice %215 {offsets = [24, 0], sizes = [8, 2], strides = [1, 1]} : vector<32x2xf32> to vector<8x2xf32>
    %cst_84 = arith.constant 5.000000e-01 : f32
    %228 = vector.broadcast %cst_84 : f32 to vector<8x2xf32>
    %229 = arith.mulf %228, %227 : vector<8x2xf32>
    %cst_85 = arith.constant 5.000000e-01 : f32
    %230 = vector.broadcast %cst_85 : f32 to vector<8x2xf32>
    %231 = arith.addf %229, %230 : vector<8x2xf32>
    %232 = arith.mulf %225, %202 : vector<8x2xf32>
    %233 = arith.mulf %220, %226 : vector<8x2xf32>
    %234 = arith.addf %232, %233 : vector<8x2xf32>
    %235 = math.tanh %234 : vector<8x2xf32>
    %236 = arith.mulf %231, %235 : vector<8x2xf32>
    %c48 = arith.constant 48 : index
    %c0_86 = arith.constant 0 : index
    %237 = vector.load %arg14[%c48, %c0_86] : memref<64x2xf32, #tpu.memory_space<vmem>>, vector<8x2xf32>
    tpu.vector_store %arg14[%c48, %c0_86], %236 {strides = array<i32>} : memref<64x2xf32, #tpu.memory_space<vmem>>, vector<8x2xf32>,
    %c7 = arith.constant 7 : index
    %c0_87 = arith.constant 0 : index
    %c0_88 = arith.constant 0 : index
    %238 = vector.load %arg1[%c7, %c0_87, %c0_88] : memref<8x64x2xf32, #tpu.memory_space<vmem>>, vector<1x64x2xf32>
    %239 = vector.shape_cast %238 : vector<1x64x2xf32> to vector<64x2xf32>
    %cst_89 = arith.constant dense<0.000000e+00> : vector<32x2xf32>
    %240 = tpu.matmul %0, %239, %cst_89 {dimension_numbers = #tpu.dot_dimension_numbers<[1], [0], [0], [1], [0, 0, 1, 1], [], []>} : vector<32x64xf32>, vector<64x2xf32>, vector<32x2xf32> -> vector<32x2xf32>
    %241 = vector.broadcast %2 : vector<32x1xf32> to vector<32x2xf32>
    %242 = arith.addf %240, %241 : vector<32x2xf32>
    %cst_90 = arith.constant dense<0.000000e+00> : vector<32x2xf32>
    %243 = tpu.matmul %1, %236, %cst_90 {dimension_numbers = #tpu.dot_dimension_numbers<[1], [0], [0], [1], [0, 0, 1, 1], [], []>} : vector<32x8xf32>, vector<8x2xf32>, vector<32x2xf32> -> vector<32x2xf32>
    %244 = arith.addf %242, %243 : vector<32x2xf32>
    %245 = vector.broadcast %11 : vector<32x1xf32> to vector<32x2xf32>
    %246 = arith.mulf %244, %245 : vector<32x2xf32>
    %247 = math.tanh %246 : vector<32x2xf32>
    %248 = vector.extract_strided_slice %247 {offsets = [0, 0], sizes = [8, 2], strides = [1, 1]} : vector<32x2xf32> to vector<8x2xf32>
    %cst_91 = arith.constant 5.000000e-01 : f32
    %249 = vector.broadcast %cst_91 : f32 to vector<8x2xf32>
    %250 = arith.mulf %249, %248 : vector<8x2xf32>
    %cst_92 = arith.constant 5.000000e-01 : f32
    %251 = vector.broadcast %cst_92 : f32 to vector<8x2xf32>
    %252 = arith.addf %250, %251 : vector<8x2xf32>
    %253 = vector.extract_strided_slice %247 {offsets = [8, 0], sizes = [8, 2], strides = [1, 1]} : vector<32x2xf32> to vector<8x2xf32>
    %cst_93 = arith.constant 5.000000e-01 : f32
    %254 = vector.broadcast %cst_93 : f32 to vector<8x2xf32>
    %255 = arith.mulf %254, %253 : vector<8x2xf32>
    %cst_94 = arith.constant 5.000000e-01 : f32
    %256 = vector.broadcast %cst_94 : f32 to vector<8x2xf32>
    %257 = arith.addf %255, %256 : vector<8x2xf32>
    %258 = vector.extract_strided_slice %247 {offsets = [16, 0], sizes = [8, 2], strides = [1, 1]} : vector<32x2xf32> to vector<8x2xf32>
    %259 = vector.extract_strided_slice %247 {offsets = [24, 0], sizes = [8, 2], strides = [1, 1]} : vector<32x2xf32> to vector<8x2xf32>
    %cst_95 = arith.constant 5.000000e-01 : f32
    %260 = vector.broadcast %cst_95 : f32 to vector<8x2xf32>
    %261 = arith.mulf %260, %259 : vector<8x2xf32>
    %cst_96 = arith.constant 5.000000e-01 : f32
    %262 = vector.broadcast %cst_96 : f32 to vector<8x2xf32>
    %263 = arith.addf %261, %262 : vector<8x2xf32>
    %264 = arith.mulf %257, %234 : vector<8x2xf32>
    %265 = arith.mulf %252, %258 : vector<8x2xf32>
    %266 = arith.addf %264, %265 : vector<8x2xf32>
    %267 = math.tanh %266 : vector<8x2xf32>
    %268 = arith.mulf %263, %267 : vector<8x2xf32>
    %c56 = arith.constant 56 : index
    %c0_97 = arith.constant 0 : index
    %269 = vector.load %arg14[%c56, %c0_97] : memref<64x2xf32, #tpu.memory_space<vmem>>, vector<8x2xf32>
    tpu.vector_store %arg14[%c56, %c0_97], %268 {strides = array<i32>} : memref<64x2xf32, #tpu.memory_space<vmem>>, vector<8x2xf32>,
    %c0_98 = arith.constant 0 : index
    %c0_99 = arith.constant 0 : index
    %270 = vector.load %arg14[%c0_98, %c0_99] : memref<64x2xf32, #tpu.memory_space<vmem>>, vector<64x2xf32>
    %c0_100 = arith.constant 0 : index
    %c0_101 = arith.constant 0 : index
    %271 = vector.load %arg5[%c0_100, %c0_101] : memref<32x64xf32, #tpu.memory_space<vmem>>, vector<32x64xf32>
    %cst_102 = arith.constant dense<0.000000e+00> : vector<32x2xf32>
    %272 = tpu.matmul %271, %270, %cst_102 {dimension_numbers = #tpu.dot_dimension_numbers<[1], [0], [0], [1], [0, 0, 1, 1], [], []>} : vector<32x64xf32>, vector<64x2xf32>, vector<32x2xf32> -> vector<32x2xf32>
    %c0_103 = arith.constant 0 : index
    %c0_104 = arith.constant 0 : index
    %273 = vector.load %arg6[%c0_103, %c0_104] : memref<32x1xf32, #tpu.memory_space<vmem>>, vector<32x1xf32>
    %274 = vector.broadcast %273 : vector<32x1xf32> to vector<32x2xf32>
    %275 = arith.addf %272, %274 : vector<32x2xf32>
    %cst_105 = arith.constant 0.000000e+00 : f32
    %276 = vector.broadcast %cst_105 : f32 to vector<32x2xf32>
    %277 = arith.maximumf %275, %276 : vector<32x2xf32>
    %c0_106 = arith.constant 0 : index
    %c0_107 = arith.constant 0 : index
    %278 = vector.load %arg7[%c0_106, %c0_107] : memref<32x32xf32, #tpu.memory_space<vmem>>, vector<32x32xf32>
    %cst_108 = arith.constant dense<0.000000e+00> : vector<32x2xf32>
    %279 = tpu.matmul %278, %277, %cst_108 {dimension_numbers = #tpu.dot_dimension_numbers<[1], [0], [0], [1], [0, 0, 1, 1], [], []>} : vector<32x32xf32>, vector<32x2xf32>, vector<32x2xf32> -> vector<32x2xf32>
    %c0_109 = arith.constant 0 : index
    %c0_110 = arith.constant 0 : index
    %280 = vector.load %arg8[%c0_109, %c0_110] : memref<32x1xf32, #tpu.memory_space<vmem>>, vector<32x1xf32>
    %281 = vector.broadcast %280 : vector<32x1xf32> to vector<32x2xf32>
    %282 = arith.addf %279, %281 : vector<32x2xf32>
    %cst_111 = arith.constant 3.000000e+00 : f32
    %283 = vector.broadcast %cst_111 : f32 to vector<32x2xf32>
    %284 = arith.addf %282, %283 : vector<32x2xf32>
    %cst_112 = arith.constant 0.000000e+00 : f32
    %cst_113 = arith.constant 6.000000e+00 : f32
    %285 = vector.broadcast %cst_112 : f32 to vector<32x2xf32>
    %286 = arith.maximumf %285, %284 : vector<32x2xf32>
    %287 = vector.broadcast %cst_113 : f32 to vector<32x2xf32>
    %288 = arith.minimumf %287, %286 : vector<32x2xf32>
    %289 = arith.mulf %282, %288 : vector<32x2xf32>
    %cst_114 = arith.constant 0.166666672 : f32
    %290 = vector.broadcast %cst_114 : f32 to vector<32x2xf32>
    %291 = arith.mulf %289, %290 : vector<32x2xf32>
    %c0_115 = arith.constant 0 : index
    %c0_116 = arith.constant 0 : index
    %292 = vector.load %arg9[%c0_115, %c0_116] : memref<32x32xf32, #tpu.memory_space<vmem>>, vector<32x32xf32>
    %cst_117 = arith.constant dense<0.000000e+00> : vector<32x2xf32>
    %293 = tpu.matmul %292, %291, %cst_117 {dimension_numbers = #tpu.dot_dimension_numbers<[1], [0], [0], [1], [0, 0, 1, 1], [], []>} : vector<32x32xf32>, vector<32x2xf32>, vector<32x2xf32> -> vector<32x2xf32>
    %c0_118 = arith.constant 0 : index
    %c0_119 = arith.constant 0 : index
    %294 = vector.load %arg10[%c0_118, %c0_119] : memref<32x1xf32, #tpu.memory_space<vmem>>, vector<32x1xf32>
    %295 = vector.broadcast %294 : vector<32x1xf32> to vector<32x2xf32>
    %296 = arith.addf %293, %295 : vector<32x2xf32>
    %cst_120 = arith.constant 3.000000e+00 : f32
    %297 = vector.broadcast %cst_120 : f32 to vector<32x2xf32>
    %298 = arith.addf %296, %297 : vector<32x2xf32>
    %cst_121 = arith.constant 0.000000e+00 : f32
    %cst_122 = arith.constant 6.000000e+00 : f32
    %299 = vector.broadcast %cst_121 : f32 to vector<32x2xf32>
    %300 = arith.maximumf %299, %298 : vector<32x2xf32>
    %301 = vector.broadcast %cst_122 : f32 to vector<32x2xf32>
    %302 = arith.minimumf %301, %300 : vector<32x2xf32>
    %303 = arith.mulf %296, %302 : vector<32x2xf32>
    %cst_123 = arith.constant 0.166666672 : f32
    %304 = vector.broadcast %cst_123 : f32 to vector<32x2xf32>
    %305 = arith.mulf %303, %304 : vector<32x2xf32>
    %c0_124 = arith.constant 0 : index
    %c0_125 = arith.constant 0 : index
    %306 = vector.load %arg11[%c0_124, %c0_125] : memref<8x32xf32, #tpu.memory_space<vmem>>, vector<8x32xf32>
    %cst_126 = arith.constant dense<0.000000e+00> : vector<8x2xf32>
    %307 = tpu.matmul %306, %305, %cst_126 {dimension_numbers = #tpu.dot_dimension_numbers<[1], [0], [0], [1], [0, 0, 1, 1], [], []>} : vector<8x32xf32>, vector<32x2xf32>, vector<8x2xf32> -> vector<8x2xf32>
    %c0_127 = arith.constant 0 : index
    %c0_128 = arith.constant 0 : index
    %308 = vector.load %arg12[%c0_127, %c0_128] : memref<8x1xf32, #tpu.memory_space<vmem>>, vector<8x1xf32>
    %309 = vector.broadcast %308 : vector<8x1xf32> to vector<8x2xf32>
    %310 = arith.addf %307, %309 : vector<8x2xf32>
    %311 = math.tanh %310 : vector<8x2xf32>
    %c0_129 = arith.constant 0 : index
    %c0_130 = arith.constant 0 : index
    %312 = vector.load %arg13[%c0_129, %c0_130] : memref<8x2xf32, #tpu.memory_space<vmem>>, vector<8x2xf32>
    tpu.vector_store %arg13[%c0_129, %c0_130], %311 {strides = array<i32>} : memref<8x2xf32, #tpu.memory_space<vmem>>, vector<8x2xf32>,
    return
  }
  func.func @transform_0(%arg0: i32) -> (i32, i32, i32) {
    %c0_i32 = arith.constant 0 : i32
    %c0_i32_0 = arith.constant 0 : i32
    %c0_i32_1 = arith.constant 0 : i32
    return %c0_i32, %c0_i32_0, %arg0 : i32, i32, i32
  }
  func.func @transform_1(%arg0: i32) -> (i32, i32) {
    %c0_i32 = arith.constant 0 : i32
    %c0_i32_0 = arith.constant 0 : i32
    %c0_i32_1 = arith.constant 0 : i32
    return %c0_i32, %c0_i32_0 : i32, i32
  }
  func.func @transform_2(%arg0: i32) -> (i32, i32) {
    %c0_i32 = arith.constant 0 : i32
    %c0_i32_0 = arith.constant 0 : i32
    %c0_i32_1 = arith.constant 0 : i32
    return %c0_i32, %c0_i32_0 : i32, i32
  }
  func.func @transform_3(%arg0: i32) -> (i32, i32) {
    %c0_i32 = arith.constant 0 : i32
    %c0_i32_0 = arith.constant 0 : i32
    %c0_i32_1 = arith.constant 0 : i32
    return %c0_i32, %c0_i32_0 : i32, i32
  }
  func.func @transform_4(%arg0: i32) -> (i32, i32) {
    %c0_i32 = arith.constant 0 : i32
    %c0_i32_0 = arith.constant 0 : i32
    %c0_i32_1 = arith.constant 0 : i32
    return %c0_i32, %c0_i32_0 : i32, i32
  }
  func.func @transform_5(%arg0: i32) -> (i32, i32) {
    %c0_i32 = arith.constant 0 : i32
    %c0_i32_0 = arith.constant 0 : i32
    %c0_i32_1 = arith.constant 0 : i32
    return %c0_i32, %c0_i32_0 : i32, i32
  }
  func.func @transform_6(%arg0: i32) -> (i32, i32) {
    %c0_i32 = arith.constant 0 : i32
    %c0_i32_0 = arith.constant 0 : i32
    %c0_i32_1 = arith.constant 0 : i32
    return %c0_i32, %c0_i32_0 : i32, i32
  }
  func.func @transform_7(%arg0: i32) -> (i32, i32) {
    %c0_i32 = arith.constant 0 : i32
    %c0_i32_0 = arith.constant 0 : i32
    %c0_i32_1 = arith.constant 0 : i32
    return %c0_i32, %c0_i32_0 : i32, i32
  }
  func.func @transform_8(%arg0: i32) -> (i32, i32) {
    %c0_i32 = arith.constant 0 : i32
    %c0_i32_0 = arith.constant 0 : i32
    %c0_i32_1 = arith.constant 0 : i32
    return %c0_i32, %c0_i32_0 : i32, i32
  }
  func.func @transform_9(%arg0: i32) -> (i32, i32) {
    %c0_i32 = arith.constant 0 : i32
    %c0_i32_0 = arith.constant 0 : i32
    %c0_i32_1 = arith.constant 0 : i32
    return %c0_i32, %c0_i32_0 : i32, i32
  }
  func.func @transform_10(%arg0: i32) -> (i32, i32) {
    %c0_i32 = arith.constant 0 : i32
    %c0_i32_0 = arith.constant 0 : i32
    %c0_i32_1 = arith.constant 0 : i32
    return %c0_i32, %c0_i32_0 : i32, i32
  }
  func.func @transform_11(%arg0: i32) -> (i32, i32) {
    %c0_i32 = arith.constant 0 : i32
    %c0_i32_0 = arith.constant 0 : i32
    %c0_i32_1 = arith.constant 0 : i32
    return %c0_i32, %c0_i32_0 : i32, i32
  }
  func.func @transform_12(%arg0: i32) -> (i32, i32) {
    %c0_i32 = arith.constant 0 : i32
    %c0_i32_0 = arith.constant 0 : i32
    return %c0_i32, %arg0 : i32, i32
  }
}

</mosaic_0001>

<llo_original>
// kernel: tpu_custom_call.1
$region0: #{tpu_custom_call.1}
  #allocation0 [shape = 'u32[]', space=smem, size = 0x4, offset = 0x4, fixed_abs, tag = 'smem constant byte address 0x4 - core index']
  #allocation1 [shape = 'u32[144,128]{1,0:T(1,128)}', space=vmem, size = 0x12000, scoped, tag = 'internal scratch']
  #allocation2 [shape = 'f32[64,2]{1,0:T(8,128)}', space=vmem, size = 0x8000, scoped, tag = 'scratch operand']
  %s0 = inlined_call_operand.vmem [shape: f32[8,64,2], index: 0, kind: input, shape index: {}]
  %s1 = inlined_call_operand.vmem [shape: f32[32,64], index: 1, kind: input, shape index: {}]
  %s2 = inlined_call_operand.vmem [shape: f32[32,8], index: 2, kind: input, shape index: {}]
  %s3 = inlined_call_operand.vmem [shape: f32[32,1], index: 3, kind: input, shape index: {}]
  %s4 = inlined_call_operand.vmem [shape: f32[32,64], index: 4, kind: input, shape index: {}]
  %s5 = inlined_call_operand.vmem [shape: f32[32,1], index: 5, kind: input, shape index: {}]
  %s6 = inlined_call_operand.vmem [shape: f32[32,32], index: 6, kind: input, shape index: {}]
  %s7 = inlined_call_operand.vmem [shape: f32[32,1], index: 7, kind: input, shape index: {}]
  %s8 = inlined_call_operand.vmem [shape: f32[32,32], index: 8, kind: input, shape index: {}]
  %s9 = inlined_call_operand.vmem [shape: f32[32,1], index: 9, kind: input, shape index: {}]
  %s10 = inlined_call_operand.vmem [shape: f32[8,32], index: 10, kind: input, shape index: {}]
  %s11 = inlined_call_operand.vmem [shape: f32[8,1], index: 11, kind: input, shape index: {}]
  %s12 = inlined_call_operand.vmem [shape: f32[8,2], index: 12, kind: output, shape index: {}]
  %s13 = sld [smem:[#allocation0]]
  $region58: #{tpu_custom_call.1} parent=0
    _
  %s15 = ssub.s32 1, %s13
  %s16 = scalar_select 0, %s15, %s13
  // Predicated region
  $region2: #{tpu_custom_call.1} parent=0 // pred_check
    _
  $region3: #{tpu_custom_call.1} parent=0 // pred_check_branch
    %18 = sbr.rel (0) target = $region5
  $region4: #{tpu_custom_call.1} parent=0 // pred_region
    _
  $region5: #{tpu_custom_call.1} parent=0 // pred_fallthru
    _
  // Predicated region
  $region6: #{tpu_custom_call.1} parent=0 // pred_check
    _
  $region7: #{tpu_custom_call.1} parent=0 // pred_check_branch
    %20 = sbr.rel (0) target = $region9
  $region8: #{tpu_custom_call.1} parent=0 // pred_region
    _
  $region9: #{tpu_custom_call.1} parent=0 // pred_fallthru
    _
  // Predicated region
  $region10: #{tpu_custom_call.1} parent=0 // pred_check
    _
  $region11: #{tpu_custom_call.1} parent=0 // pred_check_branch
    %22 = sbr.rel (0) target = $region13
  $region12: #{tpu_custom_call.1} parent=0 // pred_region
    _
  $region13: #{tpu_custom_call.1} parent=0 // pred_fallthru
    _
  // Predicated region
  $region14: #{tpu_custom_call.1} parent=0 // pred_check
    _
  $region15: #{tpu_custom_call.1} parent=0 // pred_check_branch
    %24 = sbr.rel (0) target = $region17
  $region16: #{tpu_custom_call.1} parent=0 // pred_region
    _
  $region17: #{tpu_custom_call.1} parent=0 // pred_fallthru
    _
  // Predicated region
  $region18: #{tpu_custom_call.1} parent=0 // pred_check
    _
  $region19: #{tpu_custom_call.1} parent=0 // pred_check_branch
    %26 = sbr.rel (0) target = $region21
  $region20: #{tpu_custom_call.1} parent=0 // pred_region
    _
  $region21: #{tpu_custom_call.1} parent=0 // pred_fallthru
    _
  // Predicated region
  $region22: #{tpu_custom_call.1} parent=0 // pred_check
    _
  $region23: #{tpu_custom_call.1} parent=0 // pred_check_branch
    %28 = sbr.rel (0) target = $region25
  $region24: #{tpu_custom_call.1} parent=0 // pred_region
    _
  $region25: #{tpu_custom_call.1} parent=0 // pred_fallthru
    _
  // Predicated region
  $region26: #{tpu_custom_call.1} parent=0 // pred_check
    _
  $region27: #{tpu_custom_call.1} parent=0 // pred_check_branch
    %30 = sbr.rel (0) target = $region29
  $region28: #{tpu_custom_call.1} parent=0 // pred_region
    _
  $region29: #{tpu_custom_call.1} parent=0 // pred_fallthru
    _
  // Predicated region
  $region30: #{tpu_custom_call.1} parent=0 // pred_check
    _
  $region31: #{tpu_custom_call.1} parent=0 // pred_check_branch
    %32 = sbr.rel (0) target = $region33
  $region32: #{tpu_custom_call.1} parent=0 // pred_region
    _
  $region33: #{tpu_custom_call.1} parent=0 // pred_fallthru
    _
  // Predicated region
  $region34: #{tpu_custom_call.1} parent=0 // pred_check
    _
  $region35: #{tpu_custom_call.1} parent=0 // pred_check_branch
    %34 = sbr.rel (0) target = $region37
  $region36: #{tpu_custom_call.1} parent=0 // pred_region
    _
  $region37: #{tpu_custom_call.1} parent=0 // pred_fallthru
    _
  // Predicated region
  $region38: #{tpu_custom_call.1} parent=0 // pred_check
    _
  $region39: #{tpu_custom_call.1} parent=0 // pred_check_branch
    %36 = sbr.rel (0) target = $region41
  $region40: #{tpu_custom_call.1} parent=0 // pred_region
    _
  $region41: #{tpu_custom_call.1} parent=0 // pred_fallthru
    _
  // Predicated region
  $region42: #{tpu_custom_call.1} parent=0 // pred_check
    _
  $region43: #{tpu_custom_call.1} parent=0 // pred_check_branch
    %38 = sbr.rel (0) target = $region45
  $region44: #{tpu_custom_call.1} parent=0 // pred_region
    _
  $region45: #{tpu_custom_call.1} parent=0 // pred_fallthru
    _
  // Predicated region
  $region46: #{tpu_custom_call.1} parent=0 // pred_check
    _
  $region47: #{tpu_custom_call.1} parent=0 // pred_check_branch
    %40 = sbr.rel (0) target = $region49
  $region48: #{tpu_custom_call.1} parent=0 // pred_region
    _
  $region49: #{tpu_custom_call.1} parent=0 // pred_fallthru
    _
  %v41 = vld [vmem:[%s1] sm:$0xff]
  %v42 = vld [vmem:[%s1 + $0x8] sm:$0xff]
  %v43 = vld [vmem:[%s1 + $0x10] sm:$0xff]
  %v44 = vld [vmem:[%s1 + $0x18] sm:$0xff]
  %v45 = vld [vmem:[%s2] sm:$0xff]
  %v46 = vld [vmem:[%s2 + $0x8] sm:$0xff]
  %v47 = vld [vmem:[%s2 + $0x10] sm:$0xff]
  %v48 = vld [vmem:[%s2 + $0x18] sm:$0xff]
  %v49 = vld [vmem:[%s3] sm:$0xff]
  %v50 = vld [vmem:[%s3 + $0x8] sm:$0xff]
  %v51 = vld [vmem:[%s3 + $0x10] sm:$0xff]
  %v52 = vld [vmem:[%s3 + $0x18] sm:$0xff]
  %v53 = vlaneseq
  %v54 = vshrl.u32 %v53, 7
  %v55 = vadd.s32 %v54, 8
  %v56 = vadd.s32 %v54, 16
  %v57 = vadd.s32 %v54, 24
  %vm58 = vcmp.ge.s32.totalorder %v54, 16
  %vm59 = vcmp.ge.s32.totalorder %v55, 16
  %vm60 = vcmp.ge.s32.totalorder %v56, 16
  %vm61 = vcmp.ge.s32.totalorder %v57, 16
  %vm62 = vcmp.lt.s32.totalorder %v54, 24
  %vm63 = vcmp.lt.s32.totalorder %v55, 24
  %vm64 = vcmp.lt.s32.totalorder %v56, 24
  %vm65 = vcmp.lt.s32.totalorder %v57, 24
  %vm66 = vmand %vm58, %vm62
  %vm67 = vmand %vm59, %vm63
  %vm68 = vmand %vm60, %vm64
  %vm69 = vmand %vm61, %vm65
  %v70 = vsel %vm66, 1.0, 0.5
  %v71 = vsel %vm67, 1.0, 0.5
  %v72 = vsel %vm68, 1.0, 0.5
  %v73 = vsel %vm69, 1.0, 0.5
  %v74 = vld [vmem:[%s0] sm:$0xff]
  %v75 = vld [vmem:[%s0 + $0x8] sm:$0xff]
  %v76 = vld [vmem:[%s0 + $0x10] sm:$0xff]
  %v77 = vld [vmem:[%s0 + $0x18] sm:$0xff]
  %v78 = vld [vmem:[%s0 + $0x20] sm:$0xff]
  %v79 = vld [vmem:[%s0 + $0x28] sm:$0xff]
  %v80 = vld [vmem:[%s0 + $0x30] sm:$0xff]
  %v81 = vld [vmem:[%s0 + $0x38] sm:$0xff]
  %83 = vset.pattern.permute.xlu0 0
  %84 = vperm.xlu0 %83, %v49
  %v85 = vpop.permute.xlu0 %84
  %88 = vset.pattern.permute.xlu0 0
  %89 = vperm.xlu0 %88, %v50
  %v90 = vpop.permute.xlu0 %89
  %93 = vset.pattern.permute.xlu0 0
  %94 = vperm.xlu0 %93, %v51
  %v95 = vpop.permute.xlu0 %94
  %98 = vset.pattern.permute.xlu0 0
  %99 = vperm.xlu0 %98, %v52
  %v100 = vpop.permute.xlu0 %99
  %vm102 = vcmask 523264
  %v104 = vsel %vm102, %v41, 0
  %v107 = vsel %vm102, %v42, 0
  %v110 = vsel %vm102, %v43, 0
  %v113 = vsel %vm102, %v44, 0
  %115 = vmatprep.subr.mxu0 0.0
  %116 = vmatpush1.msra.mxu0 %v74
  %117 = vmatprep.subr.mxu0 0.0
  %118 = vmatpush1.msra.mxu0 %v75
  %119 = vmatprep.subr.mxu0 0.0
  %120 = vmatpush1.msra.mxu0 %v76
  %121 = vmatprep.subr.mxu0 0.0
  %122 = vmatpush1.msra.mxu0 %v77
  %123 = vmatprep.subr.mxu0 0.0
  %124 = vmatpush1.msra.mxu0 %v78
  %125 = vmatprep.subr.mxu0 0.0
  %126 = vmatpush1.msra.mxu0 %v79
  %127 = vmatprep.subr.mxu0 0.0
  %128 = vmatpush1.msra.mxu0 %v80
  %129 = vmatprep.subr.mxu0 0.0
  %130 = vmatpush1.msra.mxu0 %v81
  %131 = vmatprep.subr.mxu0 0.0
  %132 = vmatpush1.msra.mxu0 0.0
  %133 = vmatprep.subr.mxu0 0.0
  %134 = vmatpush1.msra.mxu0 0.0
  %135 = vmatprep.subr.mxu0 0.0
  %136 = vmatpush1.msra.mxu0 0.0
  %137 = vmatprep.subr.mxu0 0.0
  %138 = vmatpush1.msra.mxu0 0.0
  %139 = vmatprep.subr.mxu0 0.0
  %140 = vmatpush1.msra.mxu0 0.0
  %141 = vmatprep.subr.mxu0 0.0
  %142 = vmatpush1.msra.mxu0 0.0
  %143 = vmatprep.subr.mxu0 0.0
  %144 = vmatpush1.msra.mxu0 0.0
  %145 = vmatprep.subr.mxu0 0.0
  %146 = vmatpush1.msra.mxu0 0.0
  %147 = vmatprep.subr.mxu0 0.0
  %148 = vmatpush1.msra.mxu0 0.0
  %149 = vmatprep.subr.mxu0 0.0
  %150 = vmatpush1.msra.mxu0 0.0
  %151 = vmatprep.subr.mxu0 0.0
  %152 = vmatpush1.msra.mxu0 0.0
  %153 = vmatprep.subr.mxu0 0.0
  %154 = vmatpush1.msra.mxu0 0.0
  %155 = vmatprep.subr.mxu0 0.0
  %156 = vmatpush1.msra.mxu0 0.0
  %157 = vmatprep.subr.mxu0 0.0
  %158 = vmatpush1.msra.mxu0 0.0
  %159 = vmatprep.subr.mxu0 0.0
  %160 = vmatpush1.msra.mxu0 0.0
  %161 = vmatprep.subr.mxu0 0.0
  %162 = vmatpush1.msra.mxu0 0.0
  %163 = vmatprep.subr.mxu0 0.0
  %164 = vmatpush1.msra.mxu0 0.0
  %165 = vmatprep.subr.mxu0 0.0
  %166 = vmatpush1.msra.mxu0 0.0
  %167 = vmatprep.subr.mxu0 0.0
  %168 = vmatpush1.msra.mxu0 0.0
  %169 = vmatprep.subr.mxu0 0.0
  %170 = vmatpush1.msra.mxu0 0.0
  %171 = vmatprep.subr.mxu0 0.0
  %172 = vmatpush1.msra.mxu0 0.0
  %173 = vmatprep.subr.mxu0 0.0
  %174 = vmatpush1.msra.mxu0 0.0
  %175 = vmatprep.subr.mxu0 0.0
  %176 = vmatpush1.msra.mxu0 0.0
  %177 = vmatprep.subr.mxu0 0.0
  %178 = vmatpush1.msra.mxu0 0.0
  %179 = vmatprep.mubr.f32.mxu0 0.0
  %180 = vmatmul.mubr.f32.gmra.mrb[0].mxu0 %v104
  %v181 = vpop.f32.mrb[0].mxu0
  %v182 = vadd.f32 %v85, %v181
  %v183 = vpop.f32.mrb[0].mxu0
  %184 = vmatprep.mubr.f32.mxu0 0.0
  %185 = vmatmul.mubr.f32.gmra.mrb[0].mxu0 %v107
  %v186 = vpop.f32.mrb[0].mxu0
  %v187 = vadd.f32 %v90, %v186
  %v188 = vpop.f32.mrb[0].mxu0
  %189 = vmatprep.mubr.f32.mxu0 0.0
  %190 = vmatmul.mubr.f32.gmra.mrb[0].mxu0 %v110
  %v191 = vpop.f32.mrb[0].mxu0
  %v192 = vadd.f32 %v95, %v191
  %v193 = vpop.f32.mrb[0].mxu0
  %194 = vmatprep.mubr.f32.mxu0 0.0
  %195 = vmatmul.mubr.f32.gmra.mrb[0].mxu0 %v113
  %v196 = vpop.f32.mrb[0].mxu0
  %v197 = vadd.f32 %v100, %v196
  %v198 = vpop.f32.mrb[0].mxu0
  %199 = vdwg.mxu0
  %vm200 = vcmask 64512
  %v202 = vsel %vm200, %v45, 0
  %v205 = vsel %vm200, %v46, 0
  %v208 = vsel %vm200, %v47, 0
  %v211 = vsel %vm200, %v48, 0
  %213 = vmatprep.subr.mxu0 0.0
  %214 = vmatpush1.msra.mxu0 0.0
  %215 = vmatprep.subr.mxu0 0.0
  %216 = vmatpush1.msra.mxu0 0.0
  %217 = vmatprep.subr.mxu0 0.0
  %218 = vmatpush1.msra.mxu0 0.0
  %219 = vmatprep.subr.mxu0 0.0
  %220 = vmatpush1.msra.mxu0 0.0
  %221 = vmatprep.subr.mxu0 0.0
  %222 = vmatpush1.msra.mxu0 0.0
  %223 = vmatprep.subr.mxu0 0.0
  %224 = vmatpush1.msra.mxu0 0.0
  %225 = vmatprep.subr.mxu0 0.0
  %226 = vmatpush1.msra.mxu0 0.0
  %227 = vmatprep.subr.mxu0 0.0
  %228 = vmatpush1.msra.mxu0 0.0
  %229 = vmatprep.subr.mxu0 0.0
  %230 = vmatpush1.msra.mxu0 0.0
  %231 = vmatprep.subr.mxu0 0.0
  %232 = vmatpush1.msra.mxu0 0.0
  %233 = vmatprep.subr.mxu0 0.0
  %234 = vmatpush1.msra.mxu0 0.0
  %235 = vmatprep.subr.mxu0 0.0
  %236 = vmatpush1.msra.mxu0 0.0
  %237 = vmatprep.subr.mxu0 0.0
  %238 = vmatpush1.msra.mxu0 0.0
  %239 = vmatprep.subr.mxu0 0.0
  %240 = vmatpush1.msra.mxu0 0.0
  %241 = vmatprep.subr.mxu0 0.0
  %242 = vmatpush1.msra.mxu0 0.0
  %243 = vmatprep.subr.mxu0 0.0
  %244 = vmatpush1.msra.mxu0 0.0
  %245 = vmatprep.subr.mxu0 0.0
  %246 = vmatpush1.msra.mxu0 0.0
  %247 = vmatprep.subr.mxu0 0.0
  %248 = vmatpush1.msra.mxu0 0.0
  %249 = vmatprep.subr.mxu0 0.0
  %250 = vmatpush1.msra.mxu0 0.0
  %251 = vmatprep.subr.mxu0 0.0
  %252 = vmatpush1.msra.mxu0 0.0
  %253 = vmatprep.subr.mxu0 0.0
  %254 = vmatpush1.msra.mxu0 0.0
  %255 = vmatprep.subr.mxu0 0.0
  %256 = vmatpush1.msra.mxu0 0.0
  %257 = vmatprep.subr.mxu0 0.0
  %258 = vmatpush1.msra.mxu0 0.0
  %259 = vmatprep.subr.mxu0 0.0
  %260 = vmatpush1.msra.mxu0 0.0
  %261 = vmatprep.subr.mxu0 0.0
  %262 = vmatpush1.msra.mxu0 0.0
  %263 = vmatprep.subr.mxu0 0.0
  %264 = vmatpush1.msra.mxu0 0.0
  %265 = vmatprep.subr.mxu0 0.0
  %266 = vmatpush1.msra.mxu0 0.0
  %267 = vmatprep.subr.mxu0 0.0
  %268 = vmatpush1.msra.mxu0 0.0
  %269 = vmatprep.subr.mxu0 0.0
  %270 = vmatpush1.msra.mxu0 0.0
  %271 = vmatprep.subr.mxu0 0.0
  %272 = vmatpush1.msra.mxu0 0.0
  %273 = vmatprep.subr.mxu0 0.0
  %274 = vmatpush1.msra.mxu0 0.0
  %275 = vmatprep.subr.mxu0 0.0
  %276 = vmatpush1.msra.mxu0 0.0
  %277 = vmatprep.mubr.f32.mxu0 0.0
  %278 = vmatmul.mubr.f32.gmra.mrb[0].mxu0 %v202
  %v279 = vpop.f32.mrb[0].mxu0
  %v280 = vadd.f32 0.0, %v279
  %v281 = vpop.f32.mrb[0].mxu0
  %282 = vmatprep.mubr.f32.mxu0 0.0
  %283 = vmatmul.mubr.f32.gmra.mrb[0].mxu0 %v205
  %v284 = vpop.f32.mrb[0].mxu0
  %v285 = vadd.f32 0.0, %v284
  %v286 = vpop.f32.mrb[0].mxu0
  %287 = vmatprep.mubr.f32.mxu0 0.0
  %288 = vmatmul.mubr.f32.gmra.mrb[0].mxu0 %v208
  %v289 = vpop.f32.mrb[0].mxu0
  %v290 = vadd.f32 0.0, %v289
  %v291 = vpop.f32.mrb[0].mxu0
  %292 = vmatprep.mubr.f32.mxu0 0.0
  %293 = vmatmul.mubr.f32.gmra.mrb[0].mxu0 %v211
  %v294 = vpop.f32.mrb[0].mxu0
  %v295 = vadd.f32 0.0, %v294
  %v296 = vpop.f32.mrb[0].mxu0
  %297 = vdwg.mxu0
  %v298 = vadd.f32 %v182, %v280
  %v299 = vadd.f32 %v187, %v285
  %v300 = vadd.f32 %v192, %v290
  %v301 = vadd.f32 %v197, %v295
  %v302 = vmul.f32 %v298, %v70
  %v303 = vmul.f32 %v299, %v71
  %v304 = vmul.f32 %v300, %v72
  %v305 = vmul.f32 %v301, %v73
  %v306 = vtanh.pop %v302
  %v307 = vtanh.pop %v303
  %v308 = vtanh.pop %v304
  %v309 = vtanh.pop %v305
  %v310 = vmul.f32 %v306, 0.5
  %v311 = vadd.f32 %v310, 0.5
  %v312 = vmul.f32 %v307, 0.5
  %v313 = vadd.f32 %v312, 0.5
  %v314 = vmul.f32 %v309, 0.5
  %v315 = vadd.f32 %v314, 0.5
  %v316 = vmul.f32 %v313, 0.0
  %v317 = vmul.f32 %v311, %v308
  %v318 = vadd.f32 %v316, %v317
  %v319 = vtanh.pop %v318
  %v320 = vmul.f32 %v315, %v319
  %vm321 = vcmask 15360
  %322 = vst.msk [vmem:[#allocation2] sm:$0xff] %vm321, %v320
  %s323 = scalar_lea.vmem %s0, 64
  %v324 = vld [vmem:[%s323] sm:$0xff]
  %v325 = vld [vmem:[%s323 + $0x8] sm:$0xff]
  %v326 = vld [vmem:[%s323 + $0x10] sm:$0xff]
  %v327 = vld [vmem:[%s323 + $0x18] sm:$0xff]
  %v328 = vld [vmem:[%s323 + $0x20] sm:$0xff]
  %v329 = vld [vmem:[%s323 + $0x28] sm:$0xff]
  %v330 = vld [vmem:[%s323 + $0x30] sm:$0xff]
  %v331 = vld [vmem:[%s323 + $0x38] sm:$0xff]
  %332 = vmatprep.subr.mxu0 0.0
  %333 = vmatpush1.msra.mxu0 %v324
  %334 = vmatprep.subr.mxu0 0.0
  %335 = vmatpush1.msra.mxu0 %v325
  %336 = vmatprep.subr.mxu0 0.0
  %337 = vmatpush1.msra.mxu0 %v326
  %338 = vmatprep.subr.mxu0 0.0
  %339 = vmatpush1.msra.mxu0 %v327
  %340 = vmatprep.subr.mxu0 0.0
  %341 = vmatpush1.msra.mxu0 %v328
  %342 = vmatprep.subr.mxu0 0.0
  %343 = vmatpush1.msra.mxu0 %v329
  %344 = vmatprep.subr.mxu0 0.0
  %345 = vmatpush1.msra.mxu0 %v330
  %346 = vmatprep.subr.mxu0 0.0
  %347 = vmatpush1.msra.mxu0 %v331
  %348 = vmatprep.subr.mxu0 0.0
  %349 = vmatpush1.msra.mxu0 0.0
  %350 = vmatprep.subr.mxu0 0.0
  %351 = vmatpush1.msra.mxu0 0.0
  %352 = vmatprep.subr.mxu0 0.0
  %353 = vmatpush1.msra.mxu0 0.0
  %354 = vmatprep.subr.mxu0 0.0
  %355 = vmatpush1.msra.mxu0 0.0
  %356 = vmatprep.subr.mxu0 0.0
  %357 = vmatpush1.msra.mxu0 0.0
  %358 = vmatprep.subr.mxu0 0.0
  %359 = vmatpush1.msra.mxu0 0.0
  %360 = vmatprep.subr.mxu0 0.0
  %361 = vmatpush1.msra.mxu0 0.0
  %362 = vmatprep.subr.mxu0 0.0
  %363 = vmatpush1.msra.mxu0 0.0
  %364 = vmatprep.subr.mxu0 0.0
  %365 = vmatpush1.msra.mxu0 0.0
  %366 = vmatprep.subr.mxu0 0.0
  %367 = vmatpush1.msra.mxu0 0.0
  %368 = vmatprep.subr.mxu0 0.0
  %369 = vmatpush1.msra.mxu0 0.0
  %370 = vmatprep.subr.mxu0 0.0
  %371 = vmatpush1.msra.mxu0 0.0
  %372 = vmatprep.subr.mxu0 0.0
  %373 = vmatpush1.msra.mxu0 0.0
  %374 = vmatprep.subr.mxu0 0.0
  %375 = vmatpush1.msra.mxu0 0.0
  %376 = vmatprep.subr.mxu0 0.0
  %377 = vmatpush1.msra.mxu0 0.0
  %378 = vmatprep.subr.mxu0 0.0
  %379 = vmatpush1.msra.mxu0 0.0
  %380 = vmatprep.subr.mxu0 0.0
  %381 = vmatpush1.msra.mxu0 0.0
  %382 = vmatprep.subr.mxu0 0.0
  %383 = vmatpush1.msra.mxu0 0.0
  %384 = vmatprep.subr.mxu0 0.0
  %385 = vmatpush1.msra.mxu0 0.0
  %386 = vmatprep.subr.mxu0 0.0
  %387 = vmatpush1.msra.mxu0 0.0
  %388 = vmatprep.subr.mxu0 0.0
  %389 = vmatpush1.msra.mxu0 0.0
  %390 = vmatprep.subr.mxu0 0.0
  %391 = vmatpush1.msra.mxu0 0.0
  %392 = vmatprep.subr.mxu0 0.0
  %393 = vmatpush1.msra.mxu0 0.0
  %394 = vmatprep.subr.mxu0 0.0
  %395 = vmatpush1.msra.mxu0 0.0
  %396 = vmatprep.mubr.f32.mxu0 0.0
  %397 = vmatmul.mubr.f32.gmra.mrb[0].mxu0 %v104
  %v398 = vpop.f32.mrb[0].mxu0
  %v399 = vadd.f32 %v85, %v398
  %v400 = vpop.f32.mrb[0].mxu0
  %401 = vmatprep.mubr.f32.mxu0 0.0
  %402 = vmatmul.mubr.f32.gmra.mrb[0].mxu0 %v107
  %v403 = vpop.f32.mrb[0].mxu0
  %v404 = vadd.f32 %v90, %v403
  %v405 = vpop.f32.mrb[0].mxu0
  %406 = vmatprep.mubr.f32.mxu0 0.0
  %407 = vmatmul.mubr.f32.gmra.mrb[0].mxu0 %v110
  %v408 = vpop.f32.mrb[0].mxu0
  %v409 = vadd.f32 %v95, %v408
  %v410 = vpop.f32.mrb[0].mxu0
  %411 = vmatprep.mubr.f32.mxu0 0.0
  %412 = vmatmul.mubr.f32.gmra.mrb[0].mxu0 %v113
  %v413 = vpop.f32.mrb[0].mxu0
  %v414 = vadd.f32 %v100, %v413
  %v415 = vpop.f32.mrb[0].mxu0
  %416 = vdwg.mxu0
  %417 = vmatprep.subr.mxu0 0.0
  %418 = vmatpush1.msra.mxu0 %v320
  %419 = vmatprep.subr.mxu0 0.0
  %420 = vmatpush1.msra.mxu0 0.0
  %421 = vmatprep.subr.mxu0 0.0
  %422 = vmatpush1.msra.mxu0 0.0
  %423 = vmatprep.subr.mxu0 0.0
  %424 = vmatpush1.msra.mxu0 0.0
  %425 = vmatprep.subr.mxu0 0.0
  %426 = vmatpush1.msra.mxu0 0.0
  %427 = vmatprep.subr.mxu0 0.0
  %428 = vmatpush1.msra.mxu0 0.0
  %429 = vmatprep.subr.mxu0 0.0
  %430 = vmatpush1.msra.mxu0 0.0
  %431 = vmatprep.subr.mxu0 0.0
  %432 = vmatpush1.msra.mxu0 0.0
  %433 = vmatprep.subr.mxu0 0.0
  %434 = vmatpush1.msra.mxu0 0.0
  %435 = vmatprep.subr.mxu0 0.0
  %436 = vmatpush1.msra.mxu0 0.0
  %437 = vmatprep.subr.mxu0 0.0
  %438 = vmatpush1.msra.mxu0 0.0
  %439 = vmatprep.subr.mxu0 0.0
  %440 = vmatpush1.msra.mxu0 0.0
  %441 = vmatprep.subr.mxu0 0.0
  %442 = vmatpush1.msra.mxu0 0.0
  %443 = vmatprep.subr.mxu0 0.0
  %444 = vmatpush1.msra.mxu0 0.0
  %445 = vmatprep.subr.mxu0 0.0
  %446 = vmatpush1.msra.mxu0 0.0
  %447 = vmatprep.subr.mxu0 0.0
  %448 = vmatpush1.msra.mxu0 0.0
  %449 = vmatprep.subr.mxu0 0.0
  %450 = vmatpush1.msra.mxu0 0.0
  %451 = vmatprep.subr.mxu0 0.0
  %452 = vmatpush1.msra.mxu0 0.0
  %453 = vmatprep.subr.mxu0 0.0
  %454 = vmatpush1.msra.mxu0 0.0
  %455 = vmatprep.subr.mxu0 0.0
  %456 = vmatpush1.msra.mxu0 0.0
  %457 = vmatprep.subr.mxu0 0.0
  %458 = vmatpush1.msra.mxu0 0.0
  %459 = vmatprep.subr.mxu0 0.0
  %460 = vmatpush1.msra.mxu0 0.0
  %461 = vmatprep.subr.mxu0 0.0
  %462 = vmatpush1.msra.mxu0 0.0
  %463 = vmatprep.subr.mxu0 0.0
  %464 = vmatpush1.msra.mxu0 0.0
  %465 = vmatprep.subr.mxu0 0.0
  %466 = vmatpush1.msra.mxu0 0.0
  %467 = vmatprep.subr.mxu0 0.0
  %468 = vmatpush1.msra.mxu0 0.0
  %469 = vmatprep.subr.mxu0 0.0
  %470 = vmatpush1.msra.mxu0 0.0
  %471 = vmatprep.subr.mxu0 0.0
  %472 = vmatpush1.msra.mxu0 0.0
  %473 = vmatprep.subr.mxu0 0.0
  %474 = vmatpush1.msra.mxu0 0.0
  %475 = vmatprep.subr.mxu0 0.0
  %476 = vmatpush1.msra.mxu0 0.0
  %477 = vmatprep.subr.mxu0 0.0
  %478 = vmatpush1.msra.mxu0 0.0
  %479 = vmatprep.subr.mxu0 0.0
  %480 = vmatpush1.msra.mxu0 0.0
  %481 = vmatprep.mubr.f32.mxu0 0.0
  %482 = vmatmul.mubr.f32.gmra.mrb[0].mxu0 %v202
  %v483 = vpop.f32.mrb[0].mxu0
  %v484 = vadd.f32 0.0, %v483
  %v485 = vpop.f32.mrb[0].mxu0
  %486 = vmatprep.mubr.f32.mxu0 0.0
  %487 = vmatmul.mubr.f32.gmra.mrb[0].mxu0 %v205
  %v488 = vpop.f32.mrb[0].mxu0
  %v489 = vadd.f32 0.0, %v488
  %v490 = vpop.f32.mrb[0].mxu0
  %491 = vmatprep.mubr.f32.mxu0 0.0
  %492 = vmatmul.mubr.f32.gmra.mrb[0].mxu0 %v208
  %v493 = vpop.f32.mrb[0].mxu0
  %v494 = vadd.f32 0.0, %v493
  %v495 = vpop.f32.mrb[0].mxu0
  %496 = vmatprep.mubr.f32.mxu0 0.0
  %497 = vmatmul.mubr.f32.gmra.mrb[0].mxu0 %v211
  %v498 = vpop.f32.mrb[0].mxu0
  %v499 = vadd.f32 0.0, %v498
  %v500 = vpop.f32.mrb[0].mxu0
  %501 = vdwg.mxu0
  %v502 = vadd.f32 %v399, %v484
  %v503 = vadd.f32 %v404, %v489
  %v504 = vadd.f32 %v409, %v494
  %v505 = vadd.f32 %v414, %v499
  %v506 = vmul.f32 %v502, %v70
  %v507 = vmul.f32 %v503, %v71
  %v508 = vmul.f32 %v504, %v72
  %v509 = vmul.f32 %v505, %v73
  %v510 = vtanh.pop %v506
  %v511 = vtanh.pop %v507
  %v512 = vtanh.pop %v508
  %v513 = vtanh.pop %v509
  %v514 = vmul.f32 %v510, 0.5
  %v515 = vadd.f32 %v514, 0.5
  %v516 = vmul.f32 %v511, 0.5
  %v517 = vadd.f32 %v516, 0.5
  %v518 = vmul.f32 %v513, 0.5
  %v519 = vadd.f32 %v518, 0.5
  %v520 = vmul.f32 %v517, %v318
  %v521 = vmul.f32 %v515, %v512
  %v522 = vadd.f32 %v520, %v521
  %v523 = vtanh.pop %v522
  %v524 = vmul.f32 %v519, %v523
  %525 = vst.msk [vmem:[#allocation2 + $0x8] sm:$0xff] %vm321, %v524
  %s526 = scalar_lea.vmem %s0, 128
  %v527 = vld [vmem:[%s526] sm:$0xff]
  %v528 = vld [vmem:[%s526 + $0x8] sm:$0xff]
  %v529 = vld [vmem:[%s526 + $0x10] sm:$0xff]
  %v530 = vld [vmem:[%s526 + $0x18] sm:$0xff]
  %v531 = vld [vmem:[%s526 + $0x20] sm:$0xff]
  %v532 = vld [vmem:[%s526 + $0x28] sm:$0xff]
  %v533 = vld [vmem:[%s526 + $0x30] sm:$0xff]
  %v534 = vld [vmem:[%s526 + $0x38] sm:$0xff]
  %535 = vmatprep.subr.mxu0 0.0
  %536 = vmatpush1.msra.mxu0 %v527
  %537 = vmatprep.subr.mxu0 0.0
  %538 = vmatpush1.msra.mxu0 %v528
  %539 = vmatprep.subr.mxu0 0.0
  %540 = vmatpush1.msra.mxu0 %v529
  %541 = vmatprep.subr.mxu0 0.0
  %542 = vmatpush1.msra.mxu0 %v530
  %543 = vmatprep.subr.mxu0 0.0
  %544 = vmatpush1.msra.mxu0 %v531
  %545 = vmatprep.subr.mxu0 0.0
  %546 = vmatpush1.msra.mxu0 %v532
  %547 = vmatprep.subr.mxu0 0.0
  %548 = vmatpush1.msra.mxu0 %v533
  %549 = vmatprep.subr.mxu0 0.0
  %550 = vmatpush1.msra.mxu0 %v534
  %551 = vmatprep.subr.mxu0 0.0
  %552 = vmatpush1.msra.mxu0 0.0
  %553 = vmatprep.subr.mxu0 0.0
  %554 = vmatpush1.msra.mxu0 0.0
  %555 = vmatprep.subr.mxu0 0.0
  %556 = vmatpush1.msra.mxu0 0.0
  %557 = vmatprep.subr.mxu0 0.0
  %558 = vmatpush1.msra.mxu0 0.0
  %559 = vmatprep.subr.mxu0 0.0
  %560 = vmatpush1.msra.mxu0 0.0
  %561 = vmatprep.subr.mxu0 0.0
  %562 = vmatpush1.msra.mxu0 0.0
  %563 = vmatprep.subr.mxu0 0.0
  %564 = vmatpush1.msra.mxu0 0.0
  %565 = vmatprep.subr.mxu0 0.0
  %566 = vmatpush1.msra.mxu0 0.0
  %567 = vmatprep.subr.mxu0 0.0
  %568 = vmatpush1.msra.mxu0 0.0
  %569 = vmatprep.subr.mxu0 0.0
  %570 = vmatpush1.msra.mxu0 0.0
  %571 = vmatprep.subr.mxu0 0.0
  %572 = vmatpush1.msra.mxu0 0.0
  %573 = vmatprep.subr.mxu0 0.0
  %574 = vmatpush1.msra.mxu0 0.0
  %575 = vmatprep.subr.mxu0 0.0
  %576 = vmatpush1.msra.mxu0 0.0
  %577 = vmatprep.subr.mxu0 0.0
  %578 = vmatpush1.msra.mxu0 0.0
  %579 = vmatprep.subr.mxu0 0.0
  %580 = vmatpush1.msra.mxu0 0.0
  %581 = vmatprep.subr.mxu0 0.0
  %582 = vmatpush1.msra.mxu0 0.0
  %583 = vmatprep.subr.mxu0 0.0
  %584 = vmatpush1.msra.mxu0 0.0
  %585 = vmatprep.subr.mxu0 0.0
  %586 = vmatpush1.msra.mxu0 0.0
  %587 = vmatprep.subr.mxu0 0.0
  %588 = vmatpush1.msra.mxu0 0.0
  %589 = vmatprep.subr.mxu0 0.0
  %590 = vmatpush1.msra.mxu0 0.0
  %591 = vmatprep.subr.mxu0 0.0
  %592 = vmatpush1.msra.mxu0 0.0
  %593 = vmatprep.subr.mxu0 0.0
  %594 = vmatpush1.msra.mxu0 0.0
  %595 = vmatprep.subr.mxu0 0.0
  %596 = vmatpush1.msra.mxu0 0.0
  %597 = vmatprep.subr.mxu0 0.0
  %598 = vmatpush1.msra.mxu0 0.0
  %599 = vmatprep.mubr.f32.mxu0 0.0
  %600 = vmatmul.mubr.f32.gmra.mrb[0].mxu0 %v104
  %v601 = vpop.f32.mrb[0].mxu0
  %v602 = vadd.f32 %v85, %v601
  %v603 = vpop.f32.mrb[0].mxu0
  %604 = vmatprep.mubr.f32.mxu0 0.0
  %605 = vmatmul.mubr.f32.gmra.mrb[0].mxu0 %v107
  %v606 = vpop.f32.mrb[0].mxu0
  %v607 = vadd.f32 %v90, %v606
  %v608 = vpop.f32.mrb[0].mxu0
  %609 = vmatprep.mubr.f32.mxu0 0.0
  %610 = vmatmul.mubr.f32.gmra.mrb[0].mxu0 %v110
  %v611 = vpop.f32.mrb[0].mxu0
  %v612 = vadd.f32 %v95, %v611
  %v613 = vpop.f32.mrb[0].mxu0
  %614 = vmatprep.mubr.f32.mxu0 0.0
  %615 = vmatmul.mubr.f32.gmra.mrb[0].mxu0 %v113
  %v616 = vpop.f32.mrb[0].mxu0
  %v617 = vadd.f32 %v100, %v616
  %v618 = vpop.f32.mrb[0].mxu0
  %619 = vdwg.mxu0
  %620 = vmatprep.subr.mxu0 0.0
  %621 = vmatpush1.msra.mxu0 %v524
  %622 = vmatprep.subr.mxu0 0.0
  %623 = vmatpush1.msra.mxu0 0.0
  %624 = vmatprep.subr.mxu0 0.0
  %625 = vmatpush1.msra.mxu0 0.0
  %626 = vmatprep.subr.mxu0 0.0
  %627 = vmatpush1.msra.mxu0 0.0
  %628 = vmatprep.subr.mxu0 0.0
  %629 = vmatpush1.msra.mxu0 0.0
  %630 = vmatprep.subr.mxu0 0.0
  %631 = vmatpush1.msra.mxu0 0.0
  %632 = vmatprep.subr.mxu0 0.0
  %633 = vmatpush1.msra.mxu0 0.0
  %634 = vmatprep.subr.mxu0 0.0
  %635 = vmatpush1.msra.mxu0 0.0
  %636 = vmatprep.subr.mxu0 0.0
  %637 = vmatpush1.msra.mxu0 0.0
  %638 = vmatprep.subr.mxu0 0.0
  %639 = vmatpush1.msra.mxu0 0.0
  %640 = vmatprep.subr.mxu0 0.0
  %641 = vmatpush1.msra.mxu0 0.0
  %642 = vmatprep.subr.mxu0 0.0
  %643 = vmatpush1.msra.mxu0 0.0
  %644 = vmatprep.subr.mxu0 0.0
  %645 = vmatpush1.msra.mxu0 0.0
  %646 = vmatprep.subr.mxu0 0.0
  %647 = vmatpush1.msra.mxu0 0.0
  %648 = vmatprep.subr.mxu0 0.0
  %649 = vmatpush1.msra.mxu0 0.0
  %650 = vmatprep.subr.mxu0 0.0
  %651 = vmatpush1.msra.mxu0 0.0
  %652 = vmatprep.subr.mxu0 0.0
  %653 = vmatpush1.msra.mxu0 0.0
  %654 = vmatprep.subr.mxu0 0.0
  %655 = vmatpush1.msra.mxu0 0.0
  %656 = vmatprep.subr.mxu0 0.0
  %657 = vmatpush1.msra.mxu0 0.0
  %658 = vmatprep.subr.mxu0 0.0
  %659 = vmatpush1.msra.mxu0 0.0
  %660 = vmatprep.subr.mxu0 0.0
  %661 = vmatpush1.msra.mxu0 0.0
  %662 = vmatprep.subr.mxu0 0.0
  %663 = vmatpush1.msra.mxu0 0.0
  %664 = vmatprep.subr.mxu0 0.0
  %665 = vmatpush1.msra.mxu0 0.0
  %666 = vmatprep.subr.mxu0 0.0
  %667 = vmatpush1.msra.mxu0 0.0
  %668 = vmatprep.subr.mxu0 0.0
  %669 = vmatpush1.msra.mxu0 0.0
  %670 = vmatprep.subr.mxu0 0.0
  %671 = vmatpush1.msra.mxu0 0.0
  %672 = vmatprep.subr.mxu0 0.0
  %673 = vmatpush1.msra.mxu0 0.0
  %674 = vmatprep.subr.mxu0 0.0
  %675 = vmatpush1.msra.mxu0 0.0
  %676 = vmatprep.subr.mxu0 0.0
  %677 = vmatpush1.msra.mxu0 0.0
  %678 = vmatprep.subr.mxu0 0.0
  %679 = vmatpush1.msra.mxu0 0.0
  %680 = vmatprep.subr.mxu0 0.0
  %681 = vmatpush1.msra.mxu0 0.0
  %682 = vmatprep.subr.mxu0 0.0
  %683 = vmatpush1.msra.mxu0 0.0
  %684 = vmatprep.mubr.f32.mxu0 0.0
  %685 = vmatmul.mubr.f32.gmra.mrb[0].mxu0 %v202
  %v686 = vpop.f32.mrb[0].mxu0
  %v687 = vadd.f32 0.0, %v686
  %v688 = vpop.f32.mrb[0].mxu0
  %689 = vmatprep.mubr.f32.mxu0 0.0
  %690 = vmatmul.mubr.f32.gmra.mrb[0].mxu0 %v205
  %v691 = vpop.f32.mrb[0].mxu0
  %v692 = vadd.f32 0.0, %v691
  %v693 = vpop.f32.mrb[0].mxu0
  %694 = vmatprep.mubr.f32.mxu0 0.0
  %695 = vmatmul.mubr.f32.gmra.mrb[0].mxu0 %v208
  %v696 = vpop.f32.mrb[0].mxu0
  %v697 = vadd.f32 0.0, %v696
  %v698 = vpop.f32.mrb[0].mxu0
  %699 = vmatprep.mubr.f32.mxu0 0.0
  %700 = vmatmul.mubr.f32.gmra.mrb[0].mxu0 %v211
  %v701 = vpop.f32.mrb[0].mxu0
  %v702 = vadd.f32 0.0, %v701
  %v703 = vpop.f32.mrb[0].mxu0
  %704 = vdwg.mxu0
  %v705 = vadd.f32 %v602, %v687
  %v706 = vadd.f32 %v607, %v692
  %v707 = vadd.f32 %v612, %v697
  %v708 = vadd.f32 %v617, %v702
  %v709 = vmul.f32 %v705, %v70
  %v710 = vmul.f32 %v706, %v71
  %v711 = vmul.f32 %v707, %v72
  %v712 = vmul.f32 %v708, %v73
  %v713 = vtanh.pop %v709
  %v714 = vtanh.pop %v710
  %v715 = vtanh.pop %v711
  %v716 = vtanh.pop %v712
  %v717 = vmul.f32 %v713, 0.5
  %v718 = vadd.f32 %v717, 0.5
  %v719 = vmul.f32 %v714, 0.5
  %v720 = vadd.f32 %v719, 0.5
  %v721 = vmul.f32 %v716, 0.5
  %v722 = vadd.f32 %v721, 0.5
  %v723 = vmul.f32 %v720, %v522
  %v724 = vmul.f32 %v718, %v715
  %v725 = vadd.f32 %v723, %v724
  %v726 = vtanh.pop %v725
  %v727 = vmul.f32 %v722, %v726
  %728 = vst.msk [vmem:[#allocation2 + $0x10] sm:$0xff] %vm321, %v727
  %s729 = scalar_lea.vmem %s0, 192
  %v730 = vld [vmem:[%s729] sm:$0xff]
  %v731 = vld [vmem:[%s729 + $0x8] sm:$0xff]
  %v732 = vld [vmem:[%s729 + $0x10] sm:$0xff]
  %v733 = vld [vmem:[%s729 + $0x18] sm:$0xff]
  %v734 = vld [vmem:[%s729 + $0x20] sm:$0xff]
  %v735 = vld [vmem:[%s729 + $0x28] sm:$0xff]
  %v736 = vld [vmem:[%s729 + $0x30] sm:$0xff]
  %v737 = vld [vmem:[%s729 + $0x38] sm:$0xff]
  %738 = vmatprep.subr.mxu0 0.0
  %739 = vmatpush1.msra.mxu0 %v730
  %740 = vmatprep.subr.mxu0 0.0
  %741 = vmatpush1.msra.mxu0 %v731
  %742 = vmatprep.subr.mxu0 0.0
  %743 = vmatpush1.msra.mxu0 %v732
  %744 = vmatprep.subr.mxu0 0.0
  %745 = vmatpush1.msra.mxu0 %v733
  %746 = vmatprep.subr.mxu0 0.0
  %747 = vmatpush1.msra.mxu0 %v734
  %748 = vmatprep.subr.mxu0 0.0
  %749 = vmatpush1.msra.mxu0 %v735
  %750 = vmatprep.subr.mxu0 0.0
  %751 = vmatpush1.msra.mxu0 %v736
  %752 = vmatprep.subr.mxu0 0.0
  %753 = vmatpush1.msra.mxu0 %v737
  %754 = vmatprep.subr.mxu0 0.0
  %755 = vmatpush1.msra.mxu0 0.0
  %756 = vmatprep.subr.mxu0 0.0
  %757 = vmatpush1.msra.mxu0 0.0
  %758 = vmatprep.subr.mxu0 0.0
  %759 = vmatpush1.msra.mxu0 0.0
  %760 = vmatprep.subr.mxu0 0.0
  %761 = vmatpush1.msra.mxu0 0.0
  %762 = vmatprep.subr.mxu0 0.0
  %763 = vmatpush1.msra.mxu0 0.0
  %764 = vmatprep.subr.mxu0 0.0
  %765 = vmatpush1.msra.mxu0 0.0
  %766 = vmatprep.subr.mxu0 0.0
  %767 = vmatpush1.msra.mxu0 0.0
  %768 = vmatprep.subr.mxu0 0.0
  %769 = vmatpush1.msra.mxu0 0.0
  %770 = vmatprep.subr.mxu0 0.0
  %771 = vmatpush1.msra.mxu0 0.0
  %772 = vmatprep.subr.mxu0 0.0
  %773 = vmatpush1.msra.mxu0 0.0
  %774 = vmatprep.subr.mxu0 0.0
  %775 = vmatpush1.msra.mxu0 0.0
  %776 = vmatprep.subr.mxu0 0.0
  %777 = vmatpush1.msra.mxu0 0.0
  %778 = vmatprep.subr.mxu0 0.0
  %779 = vmatpush1.msra.mxu0 0.0
  %780 = vmatprep.subr.mxu0 0.0
  %781 = vmatpush1.msra.mxu0 0.0
  %782 = vmatprep.subr.mxu0 0.0
  %783 = vmatpush1.msra.mxu0 0.0
  %784 = vmatprep.subr.mxu0 0.0
  %785 = vmatpush1.msra.mxu0 0.0
  %786 = vmatprep.subr.mxu0 0.0
  %787 = vmatpush1.msra.mxu0 0.0
  %788 = vmatprep.subr.mxu0 0.0
  %789 = vmatpush1.msra.mxu0 0.0
  %790 = vmatprep.subr.mxu0 0.0
  %791 = vmatpush1.msra.mxu0 0.0
  %792 = vmatprep.subr.mxu0 0.0
  %793 = vmatpush1.msra.mxu0 0.0
  %794 = vmatprep.subr.mxu0 0.0
  %795 = vmatpush1.msra.mxu0 0.0
  %796 = vmatprep.subr.mxu0 0.0
  %797 = vmatpush1.msra.mxu0 0.0
  %798 = vmatprep.subr.mxu0 0.0
  %799 = vmatpush1.msra.mxu0 0.0
  %800 = vmatprep.subr.mxu0 0.0
  %801 = vmatpush1.msra.mxu0 0.0
  %802 = vmatprep.mubr.f32.mxu0 0.0
  %803 = vmatmul.mubr.f32.gmra.mrb[0].mxu0 %v104
  %v804 = vpop.f32.mrb[0].mxu0
  %v805 = vadd.f32 %v85, %v804
  %v806 = vpop.f32.mrb[0].mxu0
  %807 = vmatprep.mubr.f32.mxu0 0.0
  %808 = vmatmul.mubr.f32.gmra.mrb[0].mxu0 %v107
  %v809 = vpop.f32.mrb[0].mxu0
  %v810 = vadd.f32 %v90, %v809
  %v811 = vpop.f32.mrb[0].mxu0
  %812 = vmatprep.mubr.f32.mxu0 0.0
  %813 = vmatmul.mubr.f32.gmra.mrb[0].mxu0 %v110
  %v814 = vpop.f32.mrb[0].mxu0
  %v815 = vadd.f32 %v95, %v814
  %v816 = vpop.f32.mrb[0].mxu0
  %817 = vmatprep.mubr.f32.mxu0 0.0
  %818 = vmatmul.mubr.f32.gmra.mrb[0].mxu0 %v113
  %v819 = vpop.f32.mrb[0].mxu0
  %v820 = vadd.f32 %v100, %v819
  %v821 = vpop.f32.mrb[0].mxu0
  %822 = vdwg.mxu0
  %823 = vmatprep.subr.mxu0 0.0
  %824 = vmatpush1.msra.mxu0 %v727
  %825 = vmatprep.subr.mxu0 0.0
  %826 = vmatpush1.msra.mxu0 0.0
  %827 = vmatprep.subr.mxu0 0.0
  %828 = vmatpush1.msra.mxu0 0.0
  %829 = vmatprep.subr.mxu0 0.0
  %830 = vmatpush1.msra.mxu0 0.0
  %831 = vmatprep.subr.mxu0 0.0
  %832 = vmatpush1.msra.mxu0 0.0
  %833 = vmatprep.subr.mxu0 0.0
  %834 = vmatpush1.msra.mxu0 0.0
  %835 = vmatprep.subr.mxu0 0.0
  %836 = vmatpush1.msra.mxu0 0.0
  %837 = vmatprep.subr.mxu0 0.0
  %838 = vmatpush1.msra.mxu0 0.0
  %839 = vmatprep.subr.mxu0 0.0
  %840 = vmatpush1.msra.mxu0 0.0
  %841 = vmatprep.subr.mxu0 0.0
  %842 = vmatpush1.msra.mxu0 0.0
  %843 = vmatprep.subr.mxu0 0.0
  %844 = vmatpush1.msra.mxu0 0.0
  %845 = vmatprep.subr.mxu0 0.0
  %846 = vmatpush1.msra.mxu0 0.0
  %847 = vmatprep.subr.mxu0 0.0
  %848 = vmatpush1.msra.mxu0 0.0
  %849 = vmatprep.subr.mxu0 0.0
  %850 = vmatpush1.msra.mxu0 0.0
  %851 = vmatprep.subr.mxu0 0.0
  %852 = vmatpush1.msra.mxu0 0.0
  %853 = vmatprep.subr.mxu0 0.0
  %854 = vmatpush1.msra.mxu0 0.0
  %855 = vmatprep.subr.mxu0 0.0
  %856 = vmatpush1.msra.mxu0 0.0
  %857 = vmatprep.subr.mxu0 0.0
  %858 = vmatpush1.msra.mxu0 0.0
  %859 = vmatprep.subr.mxu0 0.0
  %860 = vmatpush1.msra.mxu0 0.0
  %861 = vmatprep.subr.mxu0 0.0
  %862 = vmatpush1.msra.mxu0 0.0
  %863 = vmatprep.subr.mxu0 0.0
  %864 = vmatpush1.msra.mxu0 0.0
  %865 = vmatprep.subr.mxu0 0.0
  %866 = vmatpush1.msra.mxu0 0.0
  %867 = vmatprep.subr.mxu0 0.0
  %868 = vmatpush1.msra.mxu0 0.0
  %869 = vmatprep.subr.mxu0 0.0
  %870 = vmatpush1.msra.mxu0 0.0
  %871 = vmatprep.subr.mxu0 0.0
  %872 = vmatpush1.msra.mxu0 0.0
  %873 = vmatprep.subr.mxu0 0.0
  %874 = vmatpush1.msra.mxu0 0.0
  %875 = vmatprep.subr.mxu0 0.0
  %876 = vmatpush1.msra.mxu0 0.0
  %877 = vmatprep.subr.mxu0 0.0
  %878 = vmatpush1.msra.mxu0 0.0
  %879 = vmatprep.subr.mxu0 0.0
  %880 = vmatpush1.msra.mxu0 0.0
  %881 = vmatprep.subr.mxu0 0.0
  %882 = vmatpush1.msra.mxu0 0.0
  %883 = vmatprep.subr.mxu0 0.0
  %884 = vmatpush1.msra.mxu0 0.0
  %885 = vmatprep.subr.mxu0 0.0
  %886 = vmatpush1.msra.mxu0 0.0
  %887 = vmatprep.mubr.f32.mxu0 0.0
  %888 = vmatmul.mubr.f32.gmra.mrb[0].mxu0 %v202
  %v889 = vpop.f32.mrb[0].mxu0
  %v890 = vadd.f32 0.0, %v889
  %v891 = vpop.f32.mrb[0].mxu0
  %892 = vmatprep.mubr.f32.mxu0 0.0
  %893 = vmatmul.mubr.f32.gmra.mrb[0].mxu0 %v205
  %v894 = vpop.f32.mrb[0].mxu0
  %v895 = vadd.f32 0.0, %v894
  %v896 = vpop.f32.mrb[0].mxu0
  %897 = vmatprep.mubr.f32.mxu0 0.0
  %898 = vmatmul.mubr.f32.gmra.mrb[0].mxu0 %v208
  %v899 = vpop.f32.mrb[0].mxu0
  %v900 = vadd.f32 0.0, %v899
  %v901 = vpop.f32.mrb[0].mxu0
  %902 = vmatprep.mubr.f32.mxu0 0.0
  %903 = vmatmul.mubr.f32.gmra.mrb[0].mxu0 %v211
  %v904 = vpop.f32.mrb[0].mxu0
  %v905 = vadd.f32 0.0, %v904
  %v906 = vpop.f32.mrb[0].mxu0
  %907 = vdwg.mxu0
  %v908 = vadd.f32 %v805, %v890
  %v909 = vadd.f32 %v810, %v895
  %v910 = vadd.f32 %v815, %v900
  %v911 = vadd.f32 %v820, %v905
  %v912 = vmul.f32 %v908, %v70
  %v913 = vmul.f32 %v909, %v71
  %v914 = vmul.f32 %v910, %v72
  %v915 = vmul.f32 %v911, %v73
  %v916 = vtanh.pop %v912
  %v917 = vtanh.pop %v913
  %v918 = vtanh.pop %v914
  %v919 = vtanh.pop %v915
  %v920 = vmul.f32 %v916, 0.5
  %v921 = vadd.f32 %v920, 0.5
  %v922 = vmul.f32 %v917, 0.5
  %v923 = vadd.f32 %v922, 0.5
  %v924 = vmul.f32 %v919, 0.5
  %v925 = vadd.f32 %v924, 0.5
  %v926 = vmul.f32 %v923, %v725
  %v927 = vmul.f32 %v921, %v918
  %v928 = vadd.f32 %v926, %v927
  %v929 = vtanh.pop %v928
  %v930 = vmul.f32 %v925, %v929
  %931 = vst.msk [vmem:[#allocation2 + $0x18] sm:$0xff] %vm321, %v930
  %s932 = scalar_lea.vmem %s0, 256
  %v933 = vld [vmem:[%s932] sm:$0xff]
  %v934 = vld [vmem:[%s932 + $0x8] sm:$0xff]
  %v935 = vld [vmem:[%s932 + $0x10] sm:$0xff]
  %v936 = vld [vmem:[%s932 + $0x18] sm:$0xff]
  %v937 = vld [vmem:[%s932 + $0x20] sm:$0xff]
  %v938 = vld [vmem:[%s932 + $0x28] sm:$0xff]
  %v939 = vld [vmem:[%s932 + $0x30] sm:$0xff]
  %v940 = vld [vmem:[%s932 + $0x38] sm:$0xff]
  %941 = vmatprep.subr.mxu0 0.0
  %942 = vmatpush1.msra.mxu0 %v933
  %943 = vmatprep.subr.mxu0 0.0
  %944 = vmatpush1.msra.mxu0 %v934
  %945 = vmatprep.subr.mxu0 0.0
  %946 = vmatpush1.msra.mxu0 %v935
  %947 = vmatprep.subr.mxu0 0.0
  %948 = vmatpush1.msra.mxu0 %v936
  %949 = vmatprep.subr.mxu0 0.0
  %950 = vmatpush1.msra.mxu0 %v937
  %951 = vmatprep.subr.mxu0 0.0
  %952 = vmatpush1.msra.mxu0 %v938
  %953 = vmatprep.subr.mxu0 0.0
  %954 = vmatpush1.msra.mxu0 %v939
  %955 = vmatprep.subr.mxu0 0.0
  %956 = vmatpush1.msra.mxu0 %v940
  %957 = vmatprep.subr.mxu0 0.0
  %958 = vmatpush1.msra.mxu0 0.0
  %959 = vmatprep.subr.mxu0 0.0
  %960 = vmatpush1.msra.mxu0 0.0
  %961 = vmatprep.subr.mxu0 0.0
  %962 = vmatpush1.msra.mxu0 0.0
  %963 = vmatprep.subr.mxu0 0.0
  %964 = vmatpush1.msra.mxu0 0.0
  %965 = vmatprep.subr.mxu0 0.0
  %966 = vmatpush1.msra.mxu0 0.0
  %967 = vmatprep.subr.mxu0 0.0
  %968 = vmatpush1.msra.mxu0 0.0
  %969 = vmatprep.subr.mxu0 0.0
  %970 = vmatpush1.msra.mxu0 0.0
  %971 = vmatprep.subr.mxu0 0.0
  %972 = vmatpush1.msra.mxu0 0.0
  %973 = vmatprep.subr.mxu0 0.0
  %974 = vmatpush1.msra.mxu0 0.0
  %975 = vmatprep.subr.mxu0 0.0
  %976 = vmatpush1.msra.mxu0 0.0
  %977 = vmatprep.subr.mxu0 0.0
  %978 = vmatpush1.msra.mxu0 0.0
  %979 = vmatprep.subr.mxu0 0.0
  %980 = vmatpush1.msra.mxu0 0.0
  %981 = vmatprep.subr.mxu0 0.0
  %982 = vmatpush1.msra.mxu0 0.0
  %983 = vmatprep.subr.mxu0 0.0
  %984 = vmatpush1.msra.mxu0 0.0
  %985 = vmatprep.subr.mxu0 0.0
  %986 = vmatpush1.msra.mxu0 0.0
  %987 = vmatprep.subr.mxu0 0.0
  %988 = vmatpush1.msra.mxu0 0.0
  %989 = vmatprep.subr.mxu0 0.0
  %990 = vmatpush1.msra.mxu0 0.0
  %991 = vmatprep.subr.mxu0 0.0
  %992 = vmatpush1.msra.mxu0 0.0
  %993 = vmatprep.subr.mxu0 0.0
  %994 = vmatpush1.msra.mxu0 0.0
  %995 = vmatprep.subr.mxu0 0.0
  %996 = vmatpush1.msra.mxu0 0.0
  %997 = vmatprep.subr.mxu0 0.0
  %998 = vmatpush1.msra.mxu0 0.0
  %999 = vmatprep.subr.mxu0 0.0
  %1000 = vmatpush1.msra.mxu0 0.0
  %1001 = vmatprep.subr.mxu0 0.0
  %1002 = vmatpush1.msra.mxu0 0.0
  %1003 = vmatprep.subr.mxu0 0.0
  %1004 = vmatpush1.msra.mxu0 0.0
  %1005 = vmatprep.mubr.f32.mxu0 0.0
  %1006 = vmatmul.mubr.f32.gmra.mrb[0].mxu0 %v104
  %v1007 = vpop.f32.mrb[0].mxu0
  %v1008 = vadd.f32 %v85, %v1007
  %v1009 = vpop.f32.mrb[0].mxu0
  %1010 = vmatprep.mubr.f32.mxu0 0.0
  %1011 = vmatmul.mubr.f32.gmra.mrb[0].mxu0 %v107
  %v1012 = vpop.f32.mrb[0].mxu0
  %v1013 = vadd.f32 %v90, %v1012
  %v1014 = vpop.f32.mrb[0].mxu0
  %1015 = vmatprep.mubr.f32.mxu0 0.0
  %1016 = vmatmul.mubr.f32.gmra.mrb[0].mxu0 %v110
  %v1017 = vpop.f32.mrb[0].mxu0
  %v1018 = vadd.f32 %v95, %v1017
  %v1019 = vpop.f32.mrb[0].mxu0
  %1020 = vmatprep.mubr.f32.mxu0 0.0
  %1021 = vmatmul.mubr.f32.gmra.mrb[0].mxu0 %v113
  %v1022 = vpop.f32.mrb[0].mxu0
  %v1023 = vadd.f32 %v100, %v1022
  %v1024 = vpop.f32.mrb[0].mxu0
  %1025 = vdwg.mxu0
  %1026 = vmatprep.subr.mxu0 0.0
  %1027 = vmatpush1.msra.mxu0 %v930
  %1028 = vmatprep.subr.mxu0 0.0
  %1029 = vmatpush1.msra.mxu0 0.0
  %1030 = vmatprep.subr.mxu0 0.0
  %1031 = vmatpush1.msra.mxu0 0.0
  %1032 = vmatprep.subr.mxu0 0.0
  %1033 = vmatpush1.msra.mxu0 0.0
  %1034 = vmatprep.subr.mxu0 0.0
  %1035 = vmatpush1.msra.mxu0 0.0
  %1036 = vmatprep.subr.mxu0 0.0
  %1037 = vmatpush1.msra.mxu0 0.0
  %1038 = vmatprep.subr.mxu0 0.0
  %1039 = vmatpush1.msra.mxu0 0.0
  %1040 = vmatprep.subr.mxu0 0.0
  %1041 = vmatpush1.msra.mxu0 0.0
  %1042 = vmatprep.subr.mxu0 0.0
  %1043 = vmatpush1.msra.mxu0 0.0
  %1044 = vmatprep.subr.mxu0 0.0
  %1045 = vmatpush1.msra.mxu0 0.0
  %1046 = vmatprep.subr.mxu0 0.0
  %1047 = vmatpush1.msra.mxu0 0.0
  %1048 = vmatprep.subr.mxu0 0.0
  %1049 = vmatpush1.msra.mxu0 0.0
  %1050 = vmatprep.subr.mxu0 0.0
  %1051 = vmatpush1.msra.mxu0 0.0
  %1052 = vmatprep.subr.mxu0 0.0
  %1053 = vmatpush1.msra.mxu0 0.0
  %1054 = vmatprep.subr.mxu0 0.0
  %1055 = vmatpush1.msra.mxu0 0.0
  %1056 = vmatprep.subr.mxu0 0.0
  %1057 = vmatpush1.msra.mxu0 0.0
  %1058 = vmatprep.subr.mxu0 0.0
  %1059 = vmatpush1.msra.mxu0 0.0
  %1060 = vmatprep.subr.mxu0 0.0
  %1061 = vmatpush1.msra.mxu0 0.0
  %1062 = vmatprep.subr.mxu0 0.0
  %1063 = vmatpush1.msra.mxu0 0.0
  %1064 = vmatprep.subr.mxu0 0.0
  %1065 = vmatpush1.msra.mxu0 0.0
  %1066 = vmatprep.subr.mxu0 0.0
  %1067 = vmatpush1.msra.mxu0 0.0
  %1068 = vmatprep.subr.mxu0 0.0
  %1069 = vmatpush1.msra.mxu0 0.0
  %1070 = vmatprep.subr.mxu0 0.0
  %1071 = vmatpush1.msra.mxu0 0.0
  %1072 = vmatprep.subr.mxu0 0.0
  %1073 = vmatpush1.msra.mxu0 0.0
  %1074 = vmatprep.subr.mxu0 0.0
  %1075 = vmatpush1.msra.mxu0 0.0
  %1076 = vmatprep.subr.mxu0 0.0
  %1077 = vmatpush1.msra.mxu0 0.0
  %1078 = vmatprep.subr.mxu0 0.0
  %1079 = vmatpush1.msra.mxu0 0.0
  %1080 = vmatprep.subr.mxu0 0.0
  %1081 = vmatpush1.msra.mxu0 0.0
  %1082 = vmatprep.subr.mxu0 0.0
  %1083 = vmatpush1.msra.mxu0 0.0
  %1084 = vmatprep.subr.mxu0 0.0
  %1085 = vmatpush1.msra.mxu0 0.0
  %1086 = vmatprep.subr.mxu0 0.0
  %1087 = vmatpush1.msra.mxu0 0.0
  %1088 = vmatprep.subr.mxu0 0.0
  %1089 = vmatpush1.msra.mxu0 0.0
  %1090 = vmatprep.mubr.f32.mxu0 0.0
  %1091 = vmatmul.mubr.f32.gmra.mrb[0].mxu0 %v202
  %v1092 = vpop.f32.mrb[0].mxu0
  %v1093 = vadd.f32 0.0, %v1092
  %v1094 = vpop.f32.mrb[0].mxu0
  %1095 = vmatprep.mubr.f32.mxu0 0.0
  %1096 = vmatmul.mubr.f32.gmra.mrb[0].mxu0 %v205
  %v1097 = vpop.f32.mrb[0].mxu0
  %v1098 = vadd.f32 0.0, %v1097
  %v1099 = vpop.f32.mrb[0].mxu0
  %1100 = vmatprep.mubr.f32.mxu0 0.0
  %1101 = vmatmul.mubr.f32.gmra.mrb[0].mxu0 %v208
  %v1102 = vpop.f32.mrb[0].mxu0
  %v1103 = vadd.f32 0.0, %v1102
  %v1104 = vpop.f32.mrb[0].mxu0
  %1105 = vmatprep.mubr.f32.mxu0 0.0
  %1106 = vmatmul.mubr.f32.gmra.mrb[0].mxu0 %v211
  %v1107 = vpop.f32.mrb[0].mxu0
  %v1108 = vadd.f32 0.0, %v1107
  %v1109 = vpop.f32.mrb[0].mxu0
  %1110 = vdwg.mxu0
  %v1111 = vadd.f32 %v1008, %v1093
  %v1112 = vadd.f32 %v1013, %v1098
  %v1113 = vadd.f32 %v1018, %v1103
  %v1114 = vadd.f32 %v1023, %v1108
  %v1115 = vmul.f32 %v1111, %v70
  %v1116 = vmul.f32 %v1112, %v71
  %v1117 = vmul.f32 %v1113, %v72
  %v1118 = vmul.f32 %v1114, %v73
  %v1119 = vtanh.pop %v1115
  %v1120 = vtanh.pop %v1116
  %v1121 = vtanh.pop %v1117
  %v1122 = vtanh.pop %v1118
  %v1123 = vmul.f32 %v1119, 0.5
  %v1124 = vadd.f32 %v1123, 0.5
  %v1125 = vmul.f32 %v1120, 0.5
  %v1126 = vadd.f32 %v1125, 0.5
  %v1127 = vmul.f32 %v1122, 0.5
  %v1128 = vadd.f32 %v1127, 0.5
  %v1129 = vmul.f32 %v1126, %v928
  %v1130 = vmul.f32 %v1124, %v1121
  %v1131 = vadd.f32 %v1129, %v1130
  %v1132 = vtanh.pop %v1131
  %v1133 = vmul.f32 %v1128, %v1132
  %1134 = vst.msk [vmem:[#allocation2 + $0x20] sm:$0xff] %vm321, %v1133
  %s1135 = scalar_lea.vmem %s0, 320
  %v1136 = vld [vmem:[%s1135] sm:$0xff]
  %v1137 = vld [vmem:[%s1135 + $0x8] sm:$0xff]
  %v1138 = vld [vmem:[%s1135 + $0x10] sm:$0xff]
  %v1139 = vld [vmem:[%s1135 + $0x18] sm:$0xff]
  %v1140 = vld [vmem:[%s1135 + $0x20] sm:$0xff]
  %v1141 = vld [vmem:[%s1135 + $0x28] sm:$0xff]
  %v1142 = vld [vmem:[%s1135 + $0x30] sm:$0xff]
  %v1143 = vld [vmem:[%s1135 + $0x38] sm:$0xff]
  %1144 = vmatprep.subr.mxu0 0.0
  %1145 = vmatpush1.msra.mxu0 %v1136
  %1146 = vmatprep.subr.mxu0 0.0
  %1147 = vmatpush1.msra.mxu0 %v1137
  %1148 = vmatprep.subr.mxu0 0.0
  %1149 = vmatpush1.msra.mxu0 %v1138
  %1150 = vmatprep.subr.mxu0 0.0
  %1151 = vmatpush1.msra.mxu0 %v1139
  %1152 = vmatprep.subr.mxu0 0.0
  %1153 = vmatpush1.msra.mxu0 %v1140
  %1154 = vmatprep.subr.mxu0 0.0
  %1155 = vmatpush1.msra.mxu0 %v1141
  %1156 = vmatprep.subr.mxu0 0.0
  %1157 = vmatpush1.msra.mxu0 %v1142
  %1158 = vmatprep.subr.mxu0 0.0
  %1159 = vmatpush1.msra.mxu0 %v1143
  %1160 = vmatprep.subr.mxu0 0.0
  %1161 = vmatpush1.msra.mxu0 0.0
  %1162 = vmatprep.subr.mxu0 0.0
  %1163 = vmatpush1.msra.mxu0 0.0
  %1164 = vmatprep.subr.mxu0 0.0
  %1165 = vmatpush1.msra.mxu0 0.0
  %1166 = vmatprep.subr.mxu0 0.0
  %1167 = vmatpush1.msra.mxu0 0.0
  %1168 = vmatprep.subr.mxu0 0.0
  %1169 = vmatpush1.msra.mxu0 0.0
  %1170 = vmatprep.subr.mxu0 0.0
  %1171 = vmatpush1.msra.mxu0 0.0
  %1172 = vmatprep.subr.mxu0 0.0
  %1173 = vmatpush1.msra.mxu0 0.0
  %1174 = vmatprep.subr.mxu0 0.0
  %1175 = vmatpush1.msra.mxu0 0.0
  %1176 = vmatprep.subr.mxu0 0.0
  %1177 = vmatpush1.msra.mxu0 0.0
  %1178 = vmatprep.subr.mxu0 0.0
  %1179 = vmatpush1.msra.mxu0 0.0
  %1180 = vmatprep.subr.mxu0 0.0
  %1181 = vmatpush1.msra.mxu0 0.0
  %1182 = vmatprep.subr.mxu0 0.0
  %1183 = vmatpush1.msra.mxu0 0.0
  %1184 = vmatprep.subr.mxu0 0.0
  %1185 = vmatpush1.msra.mxu0 0.0
  %1186 = vmatprep.subr.mxu0 0.0
  %1187 = vmatpush1.msra.mxu0 0.0
  %1188 = vmatprep.subr.mxu0 0.0
  %1189 = vmatpush1.msra.mxu0 0.0
  %1190 = vmatprep.subr.mxu0 0.0
  %1191 = vmatpush1.msra.mxu0 0.0
  %1192 = vmatprep.subr.mxu0 0.0
  %1193 = vmatpush1.msra.mxu0 0.0
  %1194 = vmatprep.subr.mxu0 0.0
  %1195 = vmatpush1.msra.mxu0 0.0
  %1196 = vmatprep.subr.mxu0 0.0
  %1197 = vmatpush1.msra.mxu0 0.0
  %1198 = vmatprep.subr.mxu0 0.0
  %1199 = vmatpush1.msra.mxu0 0.0
  %1200 = vmatprep.subr.mxu0 0.0
  %1201 = vmatpush1.msra.mxu0 0.0
  %1202 = vmatprep.subr.mxu0 0.0
  %1203 = vmatpush1.msra.mxu0 0.0
  %1204 = vmatprep.subr.mxu0 0.0
  %1205 = vmatpush1.msra.mxu0 0.0
  %1206 = vmatprep.subr.mxu0 0.0
  %1207 = vmatpush1.msra.mxu0 0.0
  %1208 = vmatprep.mubr.f32.mxu0 0.0
  %1209 = vmatmul.mubr.f32.gmra.mrb[0].mxu0 %v104
  %v1210 = vpop.f32.mrb[0].mxu0
  %v1211 = vadd.f32 %v85, %v1210
  %v1212 = vpop.f32.mrb[0].mxu0
  %1213 = vmatprep.mubr.f32.mxu0 0.0
  %1214 = vmatmul.mubr.f32.gmra.mrb[0].mxu0 %v107
  %v1215 = vpop.f32.mrb[0].mxu0
  %v1216 = vadd.f32 %v90, %v1215
  %v1217 = vpop.f32.mrb[0].mxu0
  %1218 = vmatprep.mubr.f32.mxu0 0.0
  %1219 = vmatmul.mubr.f32.gmra.mrb[0].mxu0 %v110
  %v1220 = vpop.f32.mrb[0].mxu0
  %v1221 = vadd.f32 %v95, %v1220
  %v1222 = vpop.f32.mrb[0].mxu0
  %1223 = vmatprep.mubr.f32.mxu0 0.0
  %1224 = vmatmul.mubr.f32.gmra.mrb[0].mxu0 %v113
  %v1225 = vpop.f32.mrb[0].mxu0
  %v1226 = vadd.f32 %v100, %v1225
  %v1227 = vpop.f32.mrb[0].mxu0
  %1228 = vdwg.mxu0
  %1229 = vmatprep.subr.mxu0 0.0
  %1230 = vmatpush1.msra.mxu0 %v1133
  %1231 = vmatprep.subr.mxu0 0.0
  %1232 = vmatpush1.msra.mxu0 0.0
  %1233 = vmatprep.subr.mxu0 0.0
  %1234 = vmatpush1.msra.mxu0 0.0
  %1235 = vmatprep.subr.mxu0 0.0
  %1236 = vmatpush1.msra.mxu0 0.0
  %1237 = vmatprep.subr.mxu0 0.0
  %1238 = vmatpush1.msra.mxu0 0.0
  %1239 = vmatprep.subr.mxu0 0.0
  %1240 = vmatpush1.msra.mxu0 0.0
  %1241 = vmatprep.subr.mxu0 0.0
  %1242 = vmatpush1.msra.mxu0 0.0
  %1243 = vmatprep.subr.mxu0 0.0
  %1244 = vmatpush1.msra.mxu0 0.0
  %1245 = vmatprep.subr.mxu0 0.0
  %1246 = vmatpush1.msra.mxu0 0.0
  %1247 = vmatprep.subr.mxu0 0.0
  %1248 = vmatpush1.msra.mxu0 0.0
  %1249 = vmatprep.subr.mxu0 0.0
  %1250 = vmatpush1.msra.mxu0 0.0
  %1251 = vmatprep.subr.mxu0 0.0
  %1252 = vmatpush1.msra.mxu0 0.0
  %1253 = vmatprep.subr.mxu0 0.0
  %1254 = vmatpush1.msra.mxu0 0.0
  %1255 = vmatprep.subr.mxu0 0.0
  %1256 = vmatpush1.msra.mxu0 0.0
  %1257 = vmatprep.subr.mxu0 0.0
  %1258 = vmatpush1.msra.mxu0 0.0
  %1259 = vmatprep.subr.mxu0 0.0
  %1260 = vmatpush1.msra.mxu0 0.0
  %1261 = vmatprep.subr.mxu0 0.0
  %1262 = vmatpush1.msra.mxu0 0.0
  %1263 = vmatprep.subr.mxu0 0.0
  %1264 = vmatpush1.msra.mxu0 0.0
  %1265 = vmatprep.subr.mxu0 0.0
  %1266 = vmatpush1.msra.mxu0 0.0
  %1267 = vmatprep.subr.mxu0 0.0
  %1268 = vmatpush1.msra.mxu0 0.0
  %1269 = vmatprep.subr.mxu0 0.0
  %1270 = vmatpush1.msra.mxu0 0.0
  %1271 = vmatprep.subr.mxu0 0.0
  %1272 = vmatpush1.msra.mxu0 0.0
  %1273 = vmatprep.subr.mxu0 0.0
  %1274 = vmatpush1.msra.mxu0 0.0
  %1275 = vmatprep.subr.mxu0 0.0
  %1276 = vmatpush1.msra.mxu0 0.0
  %1277 = vmatprep.subr.mxu0 0.0
  %1278 = vmatpush1.msra.mxu0 0.0
  %1279 = vmatprep.subr.mxu0 0.0
  %1280 = vmatpush1.msra.mxu0 0.0
  %1281 = vmatprep.subr.mxu0 0.0
  %1282 = vmatpush1.msra.mxu0 0.0
  %1283 = vmatprep.subr.mxu0 0.0
  %1284 = vmatpush1.msra.mxu0 0.0
  %1285 = vmatprep.subr.mxu0 0.0
  %1286 = vmatpush1.msra.mxu0 0.0
  %1287 = vmatprep.subr.mxu0 0.0
  %1288 = vmatpush1.msra.mxu0 0.0
  %1289 = vmatprep.subr.mxu0 0.0
  %1290 = vmatpush1.msra.mxu0 0.0
  %1291 = vmatprep.subr.mxu0 0.0
  %1292 = vmatpush1.msra.mxu0 0.0
  %1293 = vmatprep.mubr.f32.mxu0 0.0
  %1294 = vmatmul.mubr.f32.gmra.mrb[0].mxu0 %v202
  %v1295 = vpop.f32.mrb[0].mxu0
  %v1296 = vadd.f32 0.0, %v1295
  %v1297 = vpop.f32.mrb[0].mxu0
  %1298 = vmatprep.mubr.f32.mxu0 0.0
  %1299 = vmatmul.mubr.f32.gmra.mrb[0].mxu0 %v205
  %v1300 = vpop.f32.mrb[0].mxu0
  %v1301 = vadd.f32 0.0, %v1300
  %v1302 = vpop.f32.mrb[0].mxu0
  %1303 = vmatprep.mubr.f32.mxu0 0.0
  %1304 = vmatmul.mubr.f32.gmra.mrb[0].mxu0 %v208
  %v1305 = vpop.f32.mrb[0].mxu0
  %v1306 = vadd.f32 0.0, %v1305
  %v1307 = vpop.f32.mrb[0].mxu0
  %1308 = vmatprep.mubr.f32.mxu0 0.0
  %1309 = vmatmul.mubr.f32.gmra.mrb[0].mxu0 %v211
  %v1310 = vpop.f32.mrb[0].mxu0
  %v1311 = vadd.f32 0.0, %v1310
  %v1312 = vpop.f32.mrb[0].mxu0
  %1313 = vdwg.mxu0
  %v1314 = vadd.f32 %v1211, %v1296
  %v1315 = vadd.f32 %v1216, %v1301
  %v1316 = vadd.f32 %v1221, %v1306
  %v1317 = vadd.f32 %v1226, %v1311
  %v1318 = vmul.f32 %v1314, %v70
  %v1319 = vmul.f32 %v1315, %v71
  %v1320 = vmul.f32 %v1316, %v72
  %v1321 = vmul.f32 %v1317, %v73
  %v1322 = vtanh.pop %v1318
  %v1323 = vtanh.pop %v1319
  %v1324 = vtanh.pop %v1320
  %v1325 = vtanh.pop %v1321
  %v1326 = vmul.f32 %v1322, 0.5
  %v1327 = vadd.f32 %v1326, 0.5
  %v1328 = vmul.f32 %v1323, 0.5
  %v1329 = vadd.f32 %v1328, 0.5
  %v1330 = vmul.f32 %v1325, 0.5
  %v1331 = vadd.f32 %v1330, 0.5
  %v1332 = vmul.f32 %v1329, %v1131
  %v1333 = vmul.f32 %v1327, %v1324
  %v1334 = vadd.f32 %v1332, %v1333
  %v1335 = vtanh.pop %v1334
  %v1336 = vmul.f32 %v1331, %v1335
  %1337 = vst.msk [vmem:[#allocation2 + $0x28] sm:$0xff] %vm321, %v1336
  %s1338 = scalar_lea.vmem %s0, 384
  %v1339 = vld [vmem:[%s1338] sm:$0xff]
  %v1340 = vld [vmem:[%s1338 + $0x8] sm:$0xff]
  %v1341 = vld [vmem:[%s1338 + $0x10] sm:$0xff]
  %v1342 = vld [vmem:[%s1338 + $0x18] sm:$0xff]
  %v1343 = vld [vmem:[%s1338 + $0x20] sm:$0xff]
  %v1344 = vld [vmem:[%s1338 + $0x28] sm:$0xff]
  %v1345 = vld [vmem:[%s1338 + $0x30] sm:$0xff]
  %v1346 = vld [vmem:[%s1338 + $0x38] sm:$0xff]
  %1347 = vmatprep.subr.mxu0 0.0
  %1348 = vmatpush1.msra.mxu0 %v1339
  %1349 = vmatprep.subr.mxu0 0.0
  %1350 = vmatpush1.msra.mxu0 %v1340
  %1351 = vmatprep.subr.mxu0 0.0
  %1352 = vmatpush1.msra.mxu0 %v1341
  %1353 = vmatprep.subr.mxu0 0.0
  %1354 = vmatpush1.msra.mxu0 %v1342
  %1355 = vmatprep.subr.mxu0 0.0
  %1356 = vmatpush1.msra.mxu0 %v1343
  %1357 = vmatprep.subr.mxu0 0.0
  %1358 = vmatpush1.msra.mxu0 %v1344
  %1359 = vmatprep.subr.mxu0 0.0
  %1360 = vmatpush1.msra.mxu0 %v1345
  %1361 = vmatprep.subr.mxu0 0.0
  %1362 = vmatpush1.msra.mxu0 %v1346
  %1363 = vmatprep.subr.mxu0 0.0
  %1364 = vmatpush1.msra.mxu0 0.0
  %1365 = vmatprep.subr.mxu0 0.0
  %1366 = vmatpush1.msra.mxu0 0.0
  %1367 = vmatprep.subr.mxu0 0.0
  %1368 = vmatpush1.msra.mxu0 0.0
  %1369 = vmatprep.subr.mxu0 0.0
  %1370 = vmatpush1.msra.mxu0 0.0
  %1371 = vmatprep.subr.mxu0 0.0
  %1372 = vmatpush1.msra.mxu0 0.0
  %1373 = vmatprep.subr.mxu0 0.0
  %1374 = vmatpush1.msra.mxu0 0.0
  %1375 = vmatprep.subr.mxu0 0.0
  %1376 = vmatpush1.msra.mxu0 0.0
  %1377 = vmatprep.subr.mxu0 0.0
  %1378 = vmatpush1.msra.mxu0 0.0
  %1379 = vmatprep.subr.mxu0 0.0
  %1380 = vmatpush1.msra.mxu0 0.0
  %1381 = vmatprep.subr.mxu0 0.0
  %1382 = vmatpush1.msra.mxu0 0.0
  %1383 = vmatprep.subr.mxu0 0.0
  %1384 = vmatpush1.msra.mxu0 0.0
  %1385 = vmatprep.subr.mxu0 0.0
  %1386 = vmatpush1.msra.mxu0 0.0
  %1387 = vmatprep.subr.mxu0 0.0
  %1388 = vmatpush1.msra.mxu0 0.0
  %1389 = vmatprep.subr.mxu0 0.0
  %1390 = vmatpush1.msra.mxu0 0.0
  %1391 = vmatprep.subr.mxu0 0.0
  %1392 = vmatpush1.msra.mxu0 0.0
  %1393 = vmatprep.subr.mxu0 0.0
  %1394 = vmatpush1.msra.mxu0 0.0
  %1395 = vmatprep.subr.mxu0 0.0
  %1396 = vmatpush1.msra.mxu0 0.0
  %1397 = vmatprep.subr.mxu0 0.0
  %1398 = vmatpush1.msra.mxu0 0.0
  %1399 = vmatprep.subr.mxu0 0.0
  %1400 = vmatpush1.msra.mxu0 0.0
  %1401 = vmatprep.subr.mxu0 0.0
  %1402 = vmatpush1.msra.mxu0 0.0
  %1403 = vmatprep.subr.mxu0 0.0
  %1404 = vmatpush1.msra.mxu0 0.0
  %1405 = vmatprep.subr.mxu0 0.0
  %1406 = vmatpush1.msra.mxu0 0.0
  %1407 = vmatprep.subr.mxu0 0.0
  %1408 = vmatpush1.msra.mxu0 0.0
  %1409 = vmatprep.subr.mxu0 0.0
  %1410 = vmatpush1.msra.mxu0 0.0
  %1411 = vmatprep.mubr.f32.mxu0 0.0
  %1412 = vmatmul.mubr.f32.gmra.mrb[0].mxu0 %v104
  %v1413 = vpop.f32.mrb[0].mxu0
  %v1414 = vadd.f32 %v85, %v1413
  %v1415 = vpop.f32.mrb[0].mxu0
  %1416 = vmatprep.mubr.f32.mxu0 0.0
  %1417 = vmatmul.mubr.f32.gmra.mrb[0].mxu0 %v107
  %v1418 = vpop.f32.mrb[0].mxu0
  %v1419 = vadd.f32 %v90, %v1418
  %v1420 = vpop.f32.mrb[0].mxu0
  %1421 = vmatprep.mubr.f32.mxu0 0.0
  %1422 = vmatmul.mubr.f32.gmra.mrb[0].mxu0 %v110
  %v1423 = vpop.f32.mrb[0].mxu0
  %v1424 = vadd.f32 %v95, %v1423
  %v1425 = vpop.f32.mrb[0].mxu0
  %1426 = vmatprep.mubr.f32.mxu0 0.0
  %1427 = vmatmul.mubr.f32.gmra.mrb[0].mxu0 %v113
  %v1428 = vpop.f32.mrb[0].mxu0
  %v1429 = vadd.f32 %v100, %v1428
  %v1430 = vpop.f32.mrb[0].mxu0
  %1431 = vdwg.mxu0
  %1432 = vmatprep.subr.mxu0 0.0
  %1433 = vmatpush1.msra.mxu0 %v1336
  %1434 = vmatprep.subr.mxu0 0.0
  %1435 = vmatpush1.msra.mxu0 0.0
  %1436 = vmatprep.subr.mxu0 0.0
  %1437 = vmatpush1.msra.mxu0 0.0
  %1438 = vmatprep.subr.mxu0 0.0
  %1439 = vmatpush1.msra.mxu0 0.0
  %1440 = vmatprep.subr.mxu0 0.0
  %1441 = vmatpush1.msra.mxu0 0.0
  %1442 = vmatprep.subr.mxu0 0.0
  %1443 = vmatpush1.msra.mxu0 0.0
  %1444 = vmatprep.subr.mxu0 0.0
  %1445 = vmatpush1.msra.mxu0 0.0
  %1446 = vmatprep.subr.mxu0 0.0
  %1447 = vmatpush1.msra.mxu0 0.0
  %1448 = vmatprep.subr.mxu0 0.0
  %1449 = vmatpush1.msra.mxu0 0.0
  %1450 = vmatprep.subr.mxu0 0.0
  %1451 = vmatpush1.msra.mxu0 0.0
  %1452 = vmatprep.subr.mxu0 0.0
  %1453 = vmatpush1.msra.mxu0 0.0
  %1454 = vmatprep.subr.mxu0 0.0
  %1455 = vmatpush1.msra.mxu0 0.0
  %1456 = vmatprep.subr.mxu0 0.0
  %1457 = vmatpush1.msra.mxu0 0.0
  %1458 = vmatprep.subr.mxu0 0.0
  %1459 = vmatpush1.msra.mxu0 0.0
  %1460 = vmatprep.subr.mxu0 0.0
  %1461 = vmatpush1.msra.mxu0 0.0
  %1462 = vmatprep.subr.mxu0 0.0
  %1463 = vmatpush1.msra.mxu0 0.0
  %1464 = vmatprep.subr.mxu0 0.0
  %1465 = vmatpush1.msra.mxu0 0.0
  %1466 = vmatprep.subr.mxu0 0.0
  %1467 = vmatpush1.msra.mxu0 0.0
  %1468 = vmatprep.subr.mxu0 0.0
  %1469 = vmatpush1.msra.mxu0 0.0
  %1470 = vmatprep.subr.mxu0 0.0
  %1471 = vmatpush1.msra.mxu0 0.0
  %1472 = vmatprep.subr.mxu0 0.0
  %1473 = vmatpush1.msra.mxu0 0.0
  %1474 = vmatprep.subr.mxu0 0.0
  %1475 = vmatpush1.msra.mxu0 0.0
  %1476 = vmatprep.subr.mxu0 0.0
  %1477 = vmatpush1.msra.mxu0 0.0
  %1478 = vmatprep.subr.mxu0 0.0
  %1479 = vmatpush1.msra.mxu0 0.0
  %1480 = vmatprep.subr.mxu0 0.0
  %1481 = vmatpush1.msra.mxu0 0.0
  %1482 = vmatprep.subr.mxu0 0.0
  %1483 = vmatpush1.msra.mxu0 0.0
  %1484 = vmatprep.subr.mxu0 0.0
  %1485 = vmatpush1.msra.mxu0 0.0
  %1486 = vmatprep.subr.mxu0 0.0
  %1487 = vmatpush1.msra.mxu0 0.0
  %1488 = vmatprep.subr.mxu0 0.0
  %1489 = vmatpush1.msra.mxu0 0.0
  %1490 = vmatprep.subr.mxu0 0.0
  %1491 = vmatpush1.msra.mxu0 0.0
  %1492 = vmatprep.subr.mxu0 0.0
  %1493 = vmatpush1.msra.mxu0 0.0
  %1494 = vmatprep.subr.mxu0 0.0
  %1495 = vmatpush1.msra.mxu0 0.0
  %1496 = vmatprep.mubr.f32.mxu0 0.0
  %1497 = vmatmul.mubr.f32.gmra.mrb[0].mxu0 %v202
  %v1498 = vpop.f32.mrb[0].mxu0
  %v1499 = vadd.f32 0.0, %v1498
  %v1500 = vpop.f32.mrb[0].mxu0
  %1501 = vmatprep.mubr.f32.mxu0 0.0
  %1502 = vmatmul.mubr.f32.gmra.mrb[0].mxu0 %v205
  %v1503 = vpop.f32.mrb[0].mxu0
  %v1504 = vadd.f32 0.0, %v1503
  %v1505 = vpop.f32.mrb[0].mxu0
  %1506 = vmatprep.mubr.f32.mxu0 0.0
  %1507 = vmatmul.mubr.f32.gmra.mrb[0].mxu0 %v208
  %v1508 = vpop.f32.mrb[0].mxu0
  %v1509 = vadd.f32 0.0, %v1508
  %v1510 = vpop.f32.mrb[0].mxu0
  %1511 = vmatprep.mubr.f32.mxu0 0.0
  %1512 = vmatmul.mubr.f32.gmra.mrb[0].mxu0 %v211
  %v1513 = vpop.f32.mrb[0].mxu0
  %v1514 = vadd.f32 0.0, %v1513
  %v1515 = vpop.f32.mrb[0].mxu0
  %1516 = vdwg.mxu0
  %v1517 = vadd.f32 %v1414, %v1499
  %v1518 = vadd.f32 %v1419, %v1504
  %v1519 = vadd.f32 %v1424, %v1509
  %v1520 = vadd.f32 %v1429, %v1514
  %v1521 = vmul.f32 %v1517, %v70
  %v1522 = vmul.f32 %v1518, %v71
  %v1523 = vmul.f32 %v1519, %v72
  %v1524 = vmul.f32 %v1520, %v73
  %v1525 = vtanh.pop %v1521
  %v1526 = vtanh.pop %v1522
  %v1527 = vtanh.pop %v1523
  %v1528 = vtanh.pop %v1524
  %v1529 = vmul.f32 %v1525, 0.5
  %v1530 = vadd.f32 %v1529, 0.5
  %v1531 = vmul.f32 %v1526, 0.5
  %v1532 = vadd.f32 %v1531, 0.5
  %v1533 = vmul.f32 %v1528, 0.5
  %v1534 = vadd.f32 %v1533, 0.5
  %v1535 = vmul.f32 %v1532, %v1334
  %v1536 = vmul.f32 %v1530, %v1527
  %v1537 = vadd.f32 %v1535, %v1536
  %v1538 = vtanh.pop %v1537
  %v1539 = vmul.f32 %v1534, %v1538
  %1540 = vst.msk [vmem:[#allocation2 + $0x30] sm:$0xff] %vm321, %v1539
  %s1541 = scalar_lea.vmem %s0, 448
  %v1542 = vld [vmem:[%s1541] sm:$0xff]
  %v1543 = vld [vmem:[%s1541 + $0x8] sm:$0xff]
  %v1544 = vld [vmem:[%s1541 + $0x10] sm:$0xff]
  %v1545 = vld [vmem:[%s1541 + $0x18] sm:$0xff]
  %v1546 = vld [vmem:[%s1541 + $0x20] sm:$0xff]
  %v1547 = vld [vmem:[%s1541 + $0x28] sm:$0xff]
  %v1548 = vld [vmem:[%s1541 + $0x30] sm:$0xff]
  %v1549 = vld [vmem:[%s1541 + $0x38] sm:$0xff]
  %1550 = vmatprep.subr.mxu0 0.0
  %1551 = vmatpush1.msra.mxu0 %v1542
  %1552 = vmatprep.subr.mxu0 0.0
  %1553 = vmatpush1.msra.mxu0 %v1543
  %1554 = vmatprep.subr.mxu0 0.0
  %1555 = vmatpush1.msra.mxu0 %v1544
  %1556 = vmatprep.subr.mxu0 0.0
  %1557 = vmatpush1.msra.mxu0 %v1545
  %1558 = vmatprep.subr.mxu0 0.0
  %1559 = vmatpush1.msra.mxu0 %v1546
  %1560 = vmatprep.subr.mxu0 0.0
  %1561 = vmatpush1.msra.mxu0 %v1547
  %1562 = vmatprep.subr.mxu0 0.0
  %1563 = vmatpush1.msra.mxu0 %v1548
  %1564 = vmatprep.subr.mxu0 0.0
  %1565 = vmatpush1.msra.mxu0 %v1549
  %1566 = vmatprep.subr.mxu0 0.0
  %1567 = vmatpush1.msra.mxu0 0.0
  %1568 = vmatprep.subr.mxu0 0.0
  %1569 = vmatpush1.msra.mxu0 0.0
  %1570 = vmatprep.subr.mxu0 0.0
  %1571 = vmatpush1.msra.mxu0 0.0
  %1572 = vmatprep.subr.mxu0 0.0
  %1573 = vmatpush1.msra.mxu0 0.0
  %1574 = vmatprep.subr.mxu0 0.0
  %1575 = vmatpush1.msra.mxu0 0.0
  %1576 = vmatprep.subr.mxu0 0.0
  %1577 = vmatpush1.msra.mxu0 0.0
  %1578 = vmatprep.subr.mxu0 0.0
  %1579 = vmatpush1.msra.mxu0 0.0
  %1580 = vmatprep.subr.mxu0 0.0
  %1581 = vmatpush1.msra.mxu0 0.0
  %1582 = vmatprep.subr.mxu0 0.0
  %1583 = vmatpush1.msra.mxu0 0.0
  %1584 = vmatprep.subr.mxu0 0.0
  %1585 = vmatpush1.msra.mxu0 0.0
  %1586 = vmatprep.subr.mxu0 0.0
  %1587 = vmatpush1.msra.mxu0 0.0
  %1588 = vmatprep.subr.mxu0 0.0
  %1589 = vmatpush1.msra.mxu0 0.0
  %1590 = vmatprep.subr.mxu0 0.0
  %1591 = vmatpush1.msra.mxu0 0.0
  %1592 = vmatprep.subr.mxu0 0.0
  %1593 = vmatpush1.msra.mxu0 0.0
  %1594 = vmatprep.subr.mxu0 0.0
  %1595 = vmatpush1.msra.mxu0 0.0
  %1596 = vmatprep.subr.mxu0 0.0
  %1597 = vmatpush1.msra.mxu0 0.0
  %1598 = vmatprep.subr.mxu0 0.0
  %1599 = vmatpush1.msra.mxu0 0.0
  %1600 = vmatprep.subr.mxu0 0.0
  %1601 = vmatpush1.msra.mxu0 0.0
  %1602 = vmatprep.subr.mxu0 0.0
  %1603 = vmatpush1.msra.mxu0 0.0
  %1604 = vmatprep.subr.mxu0 0.0
  %1605 = vmatpush1.msra.mxu0 0.0
  %1606 = vmatprep.subr.mxu0 0.0
  %1607 = vmatpush1.msra.mxu0 0.0
  %1608 = vmatprep.subr.mxu0 0.0
  %1609 = vmatpush1.msra.mxu0 0.0
  %1610 = vmatprep.subr.mxu0 0.0
  %1611 = vmatpush1.msra.mxu0 0.0
  %1612 = vmatprep.subr.mxu0 0.0
  %1613 = vmatpush1.msra.mxu0 0.0
  %1614 = vmatprep.mubr.f32.mxu0 0.0
  %1615 = vmatmul.mubr.f32.gmra.mrb[0].mxu0 %v104
  %v1616 = vpop.f32.mrb[0].mxu0
  %v1617 = vadd.f32 %v85, %v1616
  %v1618 = vpop.f32.mrb[0].mxu0
  %1619 = vmatprep.mubr.f32.mxu0 0.0
  %1620 = vmatmul.mubr.f32.gmra.mrb[0].mxu0 %v107
  %v1621 = vpop.f32.mrb[0].mxu0
  %v1622 = vadd.f32 %v90, %v1621
  %v1623 = vpop.f32.mrb[0].mxu0
  %1624 = vmatprep.mubr.f32.mxu0 0.0
  %1625 = vmatmul.mubr.f32.gmra.mrb[0].mxu0 %v110
  %v1626 = vpop.f32.mrb[0].mxu0
  %v1627 = vadd.f32 %v95, %v1626
  %v1628 = vpop.f32.mrb[0].mxu0
  %1629 = vmatprep.mubr.f32.mxu0 0.0
  %1630 = vmatmul.mubr.f32.gmra.mrb[0].mxu0 %v113
  %v1631 = vpop.f32.mrb[0].mxu0
  %v1632 = vadd.f32 %v100, %v1631
  %v1633 = vpop.f32.mrb[0].mxu0
  %1634 = vdwg.mxu0
  %1635 = vmatprep.subr.mxu0 0.0
  %1636 = vmatpush1.msra.mxu0 %v1539
  %1637 = vmatprep.subr.mxu0 0.0
  %1638 = vmatpush1.msra.mxu0 0.0
  %1639 = vmatprep.subr.mxu0 0.0
  %1640 = vmatpush1.msra.mxu0 0.0
  %1641 = vmatprep.subr.mxu0 0.0
  %1642 = vmatpush1.msra.mxu0 0.0
  %1643 = vmatprep.subr.mxu0 0.0
  %1644 = vmatpush1.msra.mxu0 0.0
  %1645 = vmatprep.subr.mxu0 0.0
  %1646 = vmatpush1.msra.mxu0 0.0
  %1647 = vmatprep.subr.mxu0 0.0
  %1648 = vmatpush1.msra.mxu0 0.0
  %1649 = vmatprep.subr.mxu0 0.0
  %1650 = vmatpush1.msra.mxu0 0.0
  %1651 = vmatprep.subr.mxu0 0.0
  %1652 = vmatpush1.msra.mxu0 0.0
  %1653 = vmatprep.subr.mxu0 0.0
  %1654 = vmatpush1.msra.mxu0 0.0
  %1655 = vmatprep.subr.mxu0 0.0
  %1656 = vmatpush1.msra.mxu0 0.0
  %1657 = vmatprep.subr.mxu0 0.0
  %1658 = vmatpush1.msra.mxu0 0.0
  %1659 = vmatprep.subr.mxu0 0.0
  %1660 = vmatpush1.msra.mxu0 0.0
  %1661 = vmatprep.subr.mxu0 0.0
  %1662 = vmatpush1.msra.mxu0 0.0
  %1663 = vmatprep.subr.mxu0 0.0
  %1664 = vmatpush1.msra.mxu0 0.0
  %1665 = vmatprep.subr.mxu0 0.0
  %1666 = vmatpush1.msra.mxu0 0.0
  %1667 = vmatprep.subr.mxu0 0.0
  %1668 = vmatpush1.msra.mxu0 0.0
  %1669 = vmatprep.subr.mxu0 0.0
  %1670 = vmatpush1.msra.mxu0 0.0
  %1671 = vmatprep.subr.mxu0 0.0
  %1672 = vmatpush1.msra.mxu0 0.0
  %1673 = vmatprep.subr.mxu0 0.0
  %1674 = vmatpush1.msra.mxu0 0.0
  %1675 = vmatprep.subr.mxu0 0.0
  %1676 = vmatpush1.msra.mxu0 0.0
  %1677 = vmatprep.subr.mxu0 0.0
  %1678 = vmatpush1.msra.mxu0 0.0
  %1679 = vmatprep.subr.mxu0 0.0
  %1680 = vmatpush1.msra.mxu0 0.0
  %1681 = vmatprep.subr.mxu0 0.0
  %1682 = vmatpush1.msra.mxu0 0.0
  %1683 = vmatprep.subr.mxu0 0.0
  %1684 = vmatpush1.msra.mxu0 0.0
  %1685 = vmatprep.subr.mxu0 0.0
  %1686 = vmatpush1.msra.mxu0 0.0
  %1687 = vmatprep.subr.mxu0 0.0
  %1688 = vmatpush1.msra.mxu0 0.0
  %1689 = vmatprep.subr.mxu0 0.0
  %1690 = vmatpush1.msra.mxu0 0.0
  %1691 = vmatprep.subr.mxu0 0.0
  %1692 = vmatpush1.msra.mxu0 0.0
  %1693 = vmatprep.subr.mxu0 0.0
  %1694 = vmatpush1.msra.mxu0 0.0
  %1695 = vmatprep.subr.mxu0 0.0
  %1696 = vmatpush1.msra.mxu0 0.0
  %1697 = vmatprep.subr.mxu0 0.0
  %1698 = vmatpush1.msra.mxu0 0.0
  %1699 = vmatprep.mubr.f32.mxu0 0.0
  %1700 = vmatmul.mubr.f32.gmra.mrb[0].mxu0 %v202
  %v1701 = vpop.f32.mrb[0].mxu0
  %v1702 = vadd.f32 0.0, %v1701
  %v1703 = vpop.f32.mrb[0].mxu0
  %1704 = vmatprep.mubr.f32.mxu0 0.0
  %1705 = vmatmul.mubr.f32.gmra.mrb[0].mxu0 %v205
  %v1706 = vpop.f32.mrb[0].mxu0
  %v1707 = vadd.f32 0.0, %v1706
  %v1708 = vpop.f32.mrb[0].mxu0
  %1709 = vmatprep.mubr.f32.mxu0 0.0
  %1710 = vmatmul.mubr.f32.gmra.mrb[0].mxu0 %v208
  %v1711 = vpop.f32.mrb[0].mxu0
  %v1712 = vadd.f32 0.0, %v1711
  %v1713 = vpop.f32.mrb[0].mxu0
  %1714 = vmatprep.mubr.f32.mxu0 0.0
  %1715 = vmatmul.mubr.f32.gmra.mrb[0].mxu0 %v211
  %v1716 = vpop.f32.mrb[0].mxu0
  %v1717 = vadd.f32 0.0, %v1716
  %v1718 = vpop.f32.mrb[0].mxu0
  %1719 = vdwg.mxu0
  %v1720 = vadd.f32 %v1617, %v1702
  %v1721 = vadd.f32 %v1622, %v1707
  %v1722 = vadd.f32 %v1627, %v1712
  %v1723 = vadd.f32 %v1632, %v1717
  %v1724 = vmul.f32 %v1720, %v70
  %v1725 = vmul.f32 %v1721, %v71
  %v1726 = vmul.f32 %v1722, %v72
  %v1727 = vmul.f32 %v1723, %v73
  %v1728 = vtanh.pop %v1724
  %v1729 = vtanh.pop %v1725
  %v1730 = vtanh.pop %v1726
  %v1731 = vtanh.pop %v1727
  %v1732 = vmul.f32 %v1728, 0.5
  %v1733 = vadd.f32 %v1732, 0.5
  %v1734 = vmul.f32 %v1729, 0.5
  %v1735 = vadd.f32 %v1734, 0.5
  %v1736 = vmul.f32 %v1731, 0.5
  %v1737 = vadd.f32 %v1736, 0.5
  %v1738 = vmul.f32 %v1735, %v1537
  %v1739 = vmul.f32 %v1733, %v1730
  %v1740 = vadd.f32 %v1738, %v1739
  %v1741 = vtanh.pop %v1740
  %v1742 = vmul.f32 %v1737, %v1741
  %1743 = vst.msk [vmem:[#allocation2 + $0x38] sm:$0xff] %vm321, %v1742
  %v1744 = vld [vmem:[#allocation2] sm:$0xff]
  %v1745 = vld [vmem:[#allocation2 + $0x8] sm:$0xff]
  %v1746 = vld [vmem:[#allocation2 + $0x10] sm:$0xff]
  %v1747 = vld [vmem:[#allocation2 + $0x18] sm:$0xff]
  %v1748 = vld [vmem:[#allocation2 + $0x20] sm:$0xff]
  %v1749 = vld [vmem:[#allocation2 + $0x28] sm:$0xff]
  %v1750 = vld [vmem:[#allocation2 + $0x30] sm:$0xff]
  %v1751 = vld [vmem:[#allocation2 + $0x38] sm:$0xff]
  %v1752 = vld [vmem:[%s4] sm:$0xff]
  %v1753 = vld [vmem:[%s4 + $0x8] sm:$0xff]
  %v1754 = vld [vmem:[%s4 + $0x10] sm:$0xff]
  %v1755 = vld [vmem:[%s4 + $0x18] sm:$0xff]
  %v1756 = vld [vmem:[%s5] sm:$0xff]
  %v1757 = vld [vmem:[%s5 + $0x8] sm:$0xff]
  %v1758 = vld [vmem:[%s5 + $0x10] sm:$0xff]
  %v1759 = vld [vmem:[%s5 + $0x18] sm:$0xff]
  %1761 = vset.pattern.permute.xlu0 0
  %1762 = vperm.xlu0 %1761, %v1756
  %v1763 = vpop.permute.xlu0 %1762
  %1766 = vset.pattern.permute.xlu0 0
  %1767 = vperm.xlu0 %1766, %v1757
  %v1768 = vpop.permute.xlu0 %1767
  %1771 = vset.pattern.permute.xlu0 0
  %1772 = vperm.xlu0 %1771, %v1758
  %v1773 = vpop.permute.xlu0 %1772
  %1776 = vset.pattern.permute.xlu0 0
  %1777 = vperm.xlu0 %1776, %v1759
  %v1778 = vpop.permute.xlu0 %1777
  %v1781 = vsel %vm102, %v1752, 0
  %v1784 = vsel %vm102, %v1753, 0
  %v1787 = vsel %vm102, %v1754, 0
  %v1790 = vsel %vm102, %v1755, 0
  %1792 = vmatprep.subr.mxu0 0.0
  %1793 = vmatpush1.msra.mxu0 %v1744
  %1794 = vmatprep.subr.mxu0 0.0
  %1795 = vmatpush1.msra.mxu0 %v1745
  %1796 = vmatprep.subr.mxu0 0.0
  %1797 = vmatpush1.msra.mxu0 %v1746
  %1798 = vmatprep.subr.mxu0 0.0
  %1799 = vmatpush1.msra.mxu0 %v1747
  %1800 = vmatprep.subr.mxu0 0.0
  %1801 = vmatpush1.msra.mxu0 %v1748
  %1802 = vmatprep.subr.mxu0 0.0
  %1803 = vmatpush1.msra.mxu0 %v1749
  %1804 = vmatprep.subr.mxu0 0.0
  %1805 = vmatpush1.msra.mxu0 %v1750
  %1806 = vmatprep.subr.mxu0 0.0
  %1807 = vmatpush1.msra.mxu0 %v1751
  %1808 = vmatprep.subr.mxu0 0.0
  %1809 = vmatpush1.msra.mxu0 0.0
  %1810 = vmatprep.subr.mxu0 0.0
  %1811 = vmatpush1.msra.mxu0 0.0
  %1812 = vmatprep.subr.mxu0 0.0
  %1813 = vmatpush1.msra.mxu0 0.0
  %1814 = vmatprep.subr.mxu0 0.0
  %1815 = vmatpush1.msra.mxu0 0.0
  %1816 = vmatprep.subr.mxu0 0.0
  %1817 = vmatpush1.msra.mxu0 0.0
  %1818 = vmatprep.subr.mxu0 0.0
  %1819 = vmatpush1.msra.mxu0 0.0
  %1820 = vmatprep.subr.mxu0 0.0
  %1821 = vmatpush1.msra.mxu0 0.0
  %1822 = vmatprep.subr.mxu0 0.0
  %1823 = vmatpush1.msra.mxu0 0.0
  %1824 = vmatprep.subr.mxu0 0.0
  %1825 = vmatpush1.msra.mxu0 0.0
  %1826 = vmatprep.subr.mxu0 0.0
  %1827 = vmatpush1.msra.mxu0 0.0
  %1828 = vmatprep.subr.mxu0 0.0
  %1829 = vmatpush1.msra.mxu0 0.0
  %1830 = vmatprep.subr.mxu0 0.0
  %1831 = vmatpush1.msra.mxu0 0.0
  %1832 = vmatprep.subr.mxu0 0.0
  %1833 = vmatpush1.msra.mxu0 0.0
  %1834 = vmatprep.subr.mxu0 0.0
  %1835 = vmatpush1.msra.mxu0 0.0
  %1836 = vmatprep.subr.mxu0 0.0
  %1837 = vmatpush1.msra.mxu0 0.0
  %1838 = vmatprep.subr.mxu0 0.0
  %1839 = vmatpush1.msra.mxu0 0.0
  %1840 = vmatprep.subr.mxu0 0.0
  %1841 = vmatpush1.msra.mxu0 0.0
  %1842 = vmatprep.subr.mxu0 0.0
  %1843 = vmatpush1.msra.mxu0 0.0
  %1844 = vmatprep.subr.mxu0 0.0
  %1845 = vmatpush1.msra.mxu0 0.0
  %1846 = vmatprep.subr.mxu0 0.0
  %1847 = vmatpush1.msra.mxu0 0.0
  %1848 = vmatprep.subr.mxu0 0.0
  %1849 = vmatpush1.msra.mxu0 0.0
  %1850 = vmatprep.subr.mxu0 0.0
  %1851 = vmatpush1.msra.mxu0 0.0
  %1852 = vmatprep.subr.mxu0 0.0
  %1853 = vmatpush1.msra.mxu0 0.0
  %1854 = vmatprep.subr.mxu0 0.0
  %1855 = vmatpush1.msra.mxu0 0.0
  %1856 = vmatprep.mubr.f32.mxu0 0.0
  %1857 = vmatmul.mubr.f32.gmra.mrb[0].mxu0 %v1781
  %v1858 = vpop.f32.mrb[0].mxu0
  %v1859 = vadd.f32 %v1763, %v1858
  %v1860 = vpop.f32.mrb[0].mxu0
  %1861 = vmatprep.mubr.f32.mxu0 0.0
  %1862 = vmatmul.mubr.f32.gmra.mrb[0].mxu0 %v1784
  %v1863 = vpop.f32.mrb[0].mxu0
  %v1864 = vadd.f32 %v1768, %v1863
  %v1865 = vpop.f32.mrb[0].mxu0
  %1866 = vmatprep.mubr.f32.mxu0 0.0
  %1867 = vmatmul.mubr.f32.gmra.mrb[0].mxu0 %v1787
  %v1868 = vpop.f32.mrb[0].mxu0
  %v1869 = vadd.f32 %v1773, %v1868
  %v1870 = vpop.f32.mrb[0].mxu0
  %1871 = vmatprep.mubr.f32.mxu0 0.0
  %1872 = vmatmul.mubr.f32.gmra.mrb[0].mxu0 %v1790
  %v1873 = vpop.f32.mrb[0].mxu0
  %v1874 = vadd.f32 %v1778, %v1873
  %v1875 = vpop.f32.mrb[0].mxu0
  %1876 = vdwg.mxu0
  %v1877 = vmax.f32 %v1859, 0.0
  %v1878 = vmax.f32 %v1864, 0.0
  %v1879 = vmax.f32 %v1869, 0.0
  %v1880 = vmax.f32 %v1874, 0.0
  %v1881 = vld [vmem:[%s6] sm:$0xff]
  %v1882 = vld [vmem:[%s6 + $0x8] sm:$0xff]
  %v1883 = vld [vmem:[%s6 + $0x10] sm:$0xff]
  %v1884 = vld [vmem:[%s6 + $0x18] sm:$0xff]
  %v1885 = vld [vmem:[%s7] sm:$0xff]
  %v1886 = vld [vmem:[%s7 + $0x8] sm:$0xff]
  %v1887 = vld [vmem:[%s7 + $0x10] sm:$0xff]
  %v1888 = vld [vmem:[%s7 + $0x18] sm:$0xff]
  %1890 = vset.pattern.permute.xlu0 0
  %1891 = vperm.xlu0 %1890, %v1885
  %v1892 = vpop.permute.xlu0 %1891
  %1895 = vset.pattern.permute.xlu0 0
  %1896 = vperm.xlu0 %1895, %v1886
  %v1897 = vpop.permute.xlu0 %1896
  %1900 = vset.pattern.permute.xlu0 0
  %1901 = vperm.xlu0 %1900, %v1887
  %v1902 = vpop.permute.xlu0 %1901
  %1905 = vset.pattern.permute.xlu0 0
  %1906 = vperm.xlu0 %1905, %v1888
  %v1907 = vpop.permute.xlu0 %1906
  %vm1909 = vcmask 261120
  %v1911 = vsel %vm1909, %v1881, 0
  %v1914 = vsel %vm1909, %v1882, 0
  %v1917 = vsel %vm1909, %v1883, 0
  %v1920 = vsel %vm1909, %v1884, 0
  %1922 = vmatprep.subr.mxu0 0.0
  %1923 = vmatpush1.msra.mxu0 %v1877
  %1924 = vmatprep.subr.mxu0 0.0
  %1925 = vmatpush1.msra.mxu0 %v1878
  %1926 = vmatprep.subr.mxu0 0.0
  %1927 = vmatpush1.msra.mxu0 %v1879
  %1928 = vmatprep.subr.mxu0 0.0
  %1929 = vmatpush1.msra.mxu0 %v1880
  %1930 = vmatprep.subr.mxu0 0.0
  %1931 = vmatpush1.msra.mxu0 0.0
  %1932 = vmatprep.subr.mxu0 0.0
  %1933 = vmatpush1.msra.mxu0 0.0
  %1934 = vmatprep.subr.mxu0 0.0
  %1935 = vmatpush1.msra.mxu0 0.0
  %1936 = vmatprep.subr.mxu0 0.0
  %1937 = vmatpush1.msra.mxu0 0.0
  %1938 = vmatprep.subr.mxu0 0.0
  %1939 = vmatpush1.msra.mxu0 0.0
  %1940 = vmatprep.subr.mxu0 0.0
  %1941 = vmatpush1.msra.mxu0 0.0
  %1942 = vmatprep.subr.mxu0 0.0
  %1943 = vmatpush1.msra.mxu0 0.0
  %1944 = vmatprep.subr.mxu0 0.0
  %1945 = vmatpush1.msra.mxu0 0.0
  %1946 = vmatprep.subr.mxu0 0.0
  %1947 = vmatpush1.msra.mxu0 0.0
  %1948 = vmatprep.subr.mxu0 0.0
  %1949 = vmatpush1.msra.mxu0 0.0
  %1950 = vmatprep.subr.mxu0 0.0
  %1951 = vmatpush1.msra.mxu0 0.0
  %1952 = vmatprep.subr.mxu0 0.0
  %1953 = vmatpush1.msra.mxu0 0.0
  %1954 = vmatprep.subr.mxu0 0.0
  %1955 = vmatpush1.msra.mxu0 0.0
  %1956 = vmatprep.subr.mxu0 0.0
  %1957 = vmatpush1.msra.mxu0 0.0
  %1958 = vmatprep.subr.mxu0 0.0
  %1959 = vmatpush1.msra.mxu0 0.0
  %1960 = vmatprep.subr.mxu0 0.0
  %1961 = vmatpush1.msra.mxu0 0.0
  %1962 = vmatprep.subr.mxu0 0.0
  %1963 = vmatpush1.msra.mxu0 0.0
  %1964 = vmatprep.subr.mxu0 0.0
  %1965 = vmatpush1.msra.mxu0 0.0
  %1966 = vmatprep.subr.mxu0 0.0
  %1967 = vmatpush1.msra.mxu0 0.0
  %1968 = vmatprep.subr.mxu0 0.0
  %1969 = vmatpush1.msra.mxu0 0.0
  %1970 = vmatprep.subr.mxu0 0.0
  %1971 = vmatpush1.msra.mxu0 0.0
  %1972 = vmatprep.subr.mxu0 0.0
  %1973 = vmatpush1.msra.mxu0 0.0
  %1974 = vmatprep.subr.mxu0 0.0
  %1975 = vmatpush1.msra.mxu0 0.0
  %1976 = vmatprep.subr.mxu0 0.0
  %1977 = vmatpush1.msra.mxu0 0.0
  %1978 = vmatprep.subr.mxu0 0.0
  %1979 = vmatpush1.msra.mxu0 0.0
  %1980 = vmatprep.subr.mxu0 0.0
  %1981 = vmatpush1.msra.mxu0 0.0
  %1982 = vmatprep.subr.mxu0 0.0
  %1983 = vmatpush1.msra.mxu0 0.0
  %1984 = vmatprep.subr.mxu0 0.0
  %1985 = vmatpush1.msra.mxu0 0.0
  %1986 = vmatprep.mubr.f32.mxu0 0.0
  %1987 = vmatmul.mubr.f32.gmra.mrb[0].mxu0 %v1911
  %v1988 = vpop.f32.mrb[0].mxu0
  %v1989 = vadd.f32 %v1892, %v1988
  %v1990 = vpop.f32.mrb[0].mxu0
  %1991 = vmatprep.mubr.f32.mxu0 0.0
  %1992 = vmatmul.mubr.f32.gmra.mrb[0].mxu0 %v1914
  %v1993 = vpop.f32.mrb[0].mxu0
  %v1994 = vadd.f32 %v1897, %v1993
  %v1995 = vpop.f32.mrb[0].mxu0
  %1996 = vmatprep.mubr.f32.mxu0 0.0
  %1997 = vmatmul.mubr.f32.gmra.mrb[0].mxu0 %v1917
  %v1998 = vpop.f32.mrb[0].mxu0
  %v1999 = vadd.f32 %v1902, %v1998
  %v2000 = vpop.f32.mrb[0].mxu0
  %2001 = vmatprep.mubr.f32.mxu0 0.0
  %2002 = vmatmul.mubr.f32.gmra.mrb[0].mxu0 %v1920
  %v2003 = vpop.f32.mrb[0].mxu0
  %v2004 = vadd.f32 %v1907, %v2003
  %v2005 = vpop.f32.mrb[0].mxu0
  %2006 = vdwg.mxu0
  %v2007 = vadd.f32 %v1989, 3.0
  %v2008 = vadd.f32 %v1994, 3.0
  %v2009 = vadd.f32 %v1999, 3.0
  %v2010 = vadd.f32 %v2004, 3.0
  %v2011 = vmax.f32 %v2007, 0.0
  %v2012 = vmax.f32 %v2008, 0.0
  %v2013 = vmax.f32 %v2009, 0.0
  %v2014 = vmax.f32 %v2010, 0.0
  %v2015 = vmin.f32 %v2011, 6.0
  %v2016 = vmin.f32 %v2012, 6.0
  %v2017 = vmin.f32 %v2013, 6.0
  %v2018 = vmin.f32 %v2014, 6.0
  %v2019 = vmul.f32 %v1989, %v2015
  %v2020 = vmul.f32 %v1994, %v2016
  %v2021 = vmul.f32 %v1999, %v2017
  %v2022 = vmul.f32 %v2004, %v2018
  %v2023 = vmul.f32 %v2019, 0.16666667
  %v2024 = vmul.f32 %v2020, 0.16666667
  %v2025 = vmul.f32 %v2021, 0.16666667
  %v2026 = vmul.f32 %v2022, 0.16666667
  %v2027 = vld [vmem:[%s8] sm:$0xff]
  %v2028 = vld [vmem:[%s8 + $0x8] sm:$0xff]
  %v2029 = vld [vmem:[%s8 + $0x10] sm:$0xff]
  %v2030 = vld [vmem:[%s8 + $0x18] sm:$0xff]
  %v2031 = vld [vmem:[%s9] sm:$0xff]
  %v2032 = vld [vmem:[%s9 + $0x8] sm:$0xff]
  %v2033 = vld [vmem:[%s9 + $0x10] sm:$0xff]
  %v2034 = vld [vmem:[%s9 + $0x18] sm:$0xff]
  %2036 = vset.pattern.permute.xlu0 0
  %2037 = vperm.xlu0 %2036, %v2031
  %v2038 = vpop.permute.xlu0 %2037
  %2041 = vset.pattern.permute.xlu0 0
  %2042 = vperm.xlu0 %2041, %v2032
  %v2043 = vpop.permute.xlu0 %2042
  %2046 = vset.pattern.permute.xlu0 0
  %2047 = vperm.xlu0 %2046, %v2033
  %v2048 = vpop.permute.xlu0 %2047
  %2051 = vset.pattern.permute.xlu0 0
  %2052 = vperm.xlu0 %2051, %v2034
  %v2053 = vpop.permute.xlu0 %2052
  %v2056 = vsel %vm1909, %v2027, 0
  %v2059 = vsel %vm1909, %v2028, 0
  %v2062 = vsel %vm1909, %v2029, 0
  %v2065 = vsel %vm1909, %v2030, 0
  %2067 = vmatprep.subr.mxu0 0.0
  %2068 = vmatpush1.msra.mxu0 %v2023
  %2069 = vmatprep.subr.mxu0 0.0
  %2070 = vmatpush1.msra.mxu0 %v2024
  %2071 = vmatprep.subr.mxu0 0.0
  %2072 = vmatpush1.msra.mxu0 %v2025
  %2073 = vmatprep.subr.mxu0 0.0
  %2074 = vmatpush1.msra.mxu0 %v2026
  %2075 = vmatprep.subr.mxu0 0.0
  %2076 = vmatpush1.msra.mxu0 0.0
  %2077 = vmatprep.subr.mxu0 0.0
  %2078 = vmatpush1.msra.mxu0 0.0
  %2079 = vmatprep.subr.mxu0 0.0
  %2080 = vmatpush1.msra.mxu0 0.0
  %2081 = vmatprep.subr.mxu0 0.0
  %2082 = vmatpush1.msra.mxu0 0.0
  %2083 = vmatprep.subr.mxu0 0.0
  %2084 = vmatpush1.msra.mxu0 0.0
  %2085 = vmatprep.subr.mxu0 0.0
  %2086 = vmatpush1.msra.mxu0 0.0
  %2087 = vmatprep.subr.mxu0 0.0
  %2088 = vmatpush1.msra.mxu0 0.0
  %2089 = vmatprep.subr.mxu0 0.0
  %2090 = vmatpush1.msra.mxu0 0.0
  %2091 = vmatprep.subr.mxu0 0.0
  %2092 = vmatpush1.msra.mxu0 0.0
  %2093 = vmatprep.subr.mxu0 0.0
  %2094 = vmatpush1.msra.mxu0 0.0
  %2095 = vmatprep.subr.mxu0 0.0
  %2096 = vmatpush1.msra.mxu0 0.0
  %2097 = vmatprep.subr.mxu0 0.0
  %2098 = vmatpush1.msra.mxu0 0.0
  %2099 = vmatprep.subr.mxu0 0.0
  %2100 = vmatpush1.msra.mxu0 0.0
  %2101 = vmatprep.subr.mxu0 0.0
  %2102 = vmatpush1.msra.mxu0 0.0
  %2103 = vmatprep.subr.mxu0 0.0
  %2104 = vmatpush1.msra.mxu0 0.0
  %2105 = vmatprep.subr.mxu0 0.0
  %2106 = vmatpush1.msra.mxu0 0.0
  %2107 = vmatprep.subr.mxu0 0.0
  %2108 = vmatpush1.msra.mxu0 0.0
  %2109 = vmatprep.subr.mxu0 0.0
  %2110 = vmatpush1.msra.mxu0 0.0
  %2111 = vmatprep.subr.mxu0 0.0
  %2112 = vmatpush1.msra.mxu0 0.0
  %2113 = vmatprep.subr.mxu0 0.0
  %2114 = vmatpush1.msra.mxu0 0.0
  %2115 = vmatprep.subr.mxu0 0.0
  %2116 = vmatpush1.msra.mxu0 0.0
  %2117 = vmatprep.subr.mxu0 0.0
  %2118 = vmatpush1.msra.mxu0 0.0
  %2119 = vmatprep.subr.mxu0 0.0
  %2120 = vmatpush1.msra.mxu0 0.0
  %2121 = vmatprep.subr.mxu0 0.0
  %2122 = vmatpush1.msra.mxu0 0.0
  %2123 = vmatprep.subr.mxu0 0.0
  %2124 = vmatpush1.msra.mxu0 0.0
  %2125 = vmatprep.subr.mxu0 0.0
  %2126 = vmatpush1.msra.mxu0 0.0
  %2127 = vmatprep.subr.mxu0 0.0
  %2128 = vmatpush1.msra.mxu0 0.0
  %2129 = vmatprep.subr.mxu0 0.0
  %2130 = vmatpush1.msra.mxu0 0.0
  %2131 = vmatprep.mubr.f32.mxu0 0.0
  %2132 = vmatmul.mubr.f32.gmra.mrb[0].mxu0 %v2056
  %v2133 = vpop.f32.mrb[0].mxu0
  %v2134 = vadd.f32 %v2038, %v2133
  %v2135 = vpop.f32.mrb[0].mxu0
  %2136 = vmatprep.mubr.f32.mxu0 0.0
  %2137 = vmatmul.mubr.f32.gmra.mrb[0].mxu0 %v2059
  %v2138 = vpop.f32.mrb[0].mxu0
  %v2139 = vadd.f32 %v2043, %v2138
  %v2140 = vpop.f32.mrb[0].mxu0
  %2141 = vmatprep.mubr.f32.mxu0 0.0
  %2142 = vmatmul.mubr.f32.gmra.mrb[0].mxu0 %v2062
  %v2143 = vpop.f32.mrb[0].mxu0
  %v2144 = vadd.f32 %v2048, %v2143
  %v2145 = vpop.f32.mrb[0].mxu0
  %2146 = vmatprep.mubr.f32.mxu0 0.0
  %2147 = vmatmul.mubr.f32.gmra.mrb[0].mxu0 %v2065
  %v2148 = vpop.f32.mrb[0].mxu0
  %v2149 = vadd.f32 %v2053, %v2148
  %v2150 = vpop.f32.mrb[0].mxu0
  %2151 = vdwg.mxu0
  %v2152 = vadd.f32 %v2134, 3.0
  %v2153 = vadd.f32 %v2139, 3.0
  %v2154 = vadd.f32 %v2144, 3.0
  %v2155 = vadd.f32 %v2149, 3.0
  %v2156 = vmax.f32 %v2152, 0.0
  %v2157 = vmax.f32 %v2153, 0.0
  %v2158 = vmax.f32 %v2154, 0.0
  %v2159 = vmax.f32 %v2155, 0.0
  %v2160 = vmin.f32 %v2156, 6.0
  %v2161 = vmin.f32 %v2157, 6.0
  %v2162 = vmin.f32 %v2158, 6.0
  %v2163 = vmin.f32 %v2159, 6.0
  %v2164 = vmul.f32 %v2134, %v2160
  %v2165 = vmul.f32 %v2139, %v2161
  %v2166 = vmul.f32 %v2144, %v2162
  %v2167 = vmul.f32 %v2149, %v2163
  %v2168 = vmul.f32 %v2164, 0.16666667
  %v2169 = vmul.f32 %v2165, 0.16666667
  %v2170 = vmul.f32 %v2166, 0.16666667
  %v2171 = vmul.f32 %v2167, 0.16666667
  %v2172 = vld [vmem:[%s10] sm:$0xff]
  %v2173 = vld [vmem:[%s11] sm:$0xff]
  %2175 = vset.pattern.permute.xlu0 0
  %2176 = vperm.xlu0 %2175, %v2173
  %v2177 = vpop.permute.xlu0 %2176
  %v2180 = vsel %vm1909, %v2172, 0
  %2182 = vmatprep.subr.mxu0 0.0
  %2183 = vmatpush1.msra.mxu0 %v2168
  %2184 = vmatprep.subr.mxu0 0.0
  %2185 = vmatpush1.msra.mxu0 %v2169
  %2186 = vmatprep.subr.mxu0 0.0
  %2187 = vmatpush1.msra.mxu0 %v2170
  %2188 = vmatprep.subr.mxu0 0.0
  %2189 = vmatpush1.msra.mxu0 %v2171
  %2190 = vmatprep.subr.mxu0 0.0
  %2191 = vmatpush1.msra.mxu0 0.0
  %2192 = vmatprep.subr.mxu0 0.0
  %2193 = vmatpush1.msra.mxu0 0.0
  %2194 = vmatprep.subr.mxu0 0.0
  %2195 = vmatpush1.msra.mxu0 0.0
  %2196 = vmatprep.subr.mxu0 0.0
  %2197 = vmatpush1.msra.mxu0 0.0
  %2198 = vmatprep.subr.mxu0 0.0
  %2199 = vmatpush1.msra.mxu0 0.0
  %2200 = vmatprep.subr.mxu0 0.0
  %2201 = vmatpush1.msra.mxu0 0.0
  %2202 = vmatprep.subr.mxu0 0.0
  %2203 = vmatpush1.msra.mxu0 0.0
  %2204 = vmatprep.subr.mxu0 0.0
  %2205 = vmatpush1.msra.mxu0 0.0
  %2206 = vmatprep.subr.mxu0 0.0
  %2207 = vmatpush1.msra.mxu0 0.0
  %2208 = vmatprep.subr.mxu0 0.0
  %2209 = vmatpush1.msra.mxu0 0.0
  %2210 = vmatprep.subr.mxu0 0.0
  %2211 = vmatpush1.msra.mxu0 0.0
  %2212 = vmatprep.subr.mxu0 0.0
  %2213 = vmatpush1.msra.mxu0 0.0
  %2214 = vmatprep.subr.mxu0 0.0
  %2215 = vmatpush1.msra.mxu0 0.0
  %2216 = vmatprep.subr.mxu0 0.0
  %2217 = vmatpush1.msra.mxu0 0.0
  %2218 = vmatprep.subr.mxu0 0.0
  %2219 = vmatpush1.msra.mxu0 0.0
  %2220 = vmatprep.subr.mxu0 0.0
  %2221 = vmatpush1.msra.mxu0 0.0
  %2222 = vmatprep.subr.mxu0 0.0
  %2223 = vmatpush1.msra.mxu0 0.0
  %2224 = vmatprep.subr.mxu0 0.0
  %2225 = vmatpush1.msra.mxu0 0.0
  %2226 = vmatprep.subr.mxu0 0.0
  %2227 = vmatpush1.msra.mxu0 0.0
  %2228 = vmatprep.subr.mxu0 0.0
  %2229 = vmatpush1.msra.mxu0 0.0
  %2230 = vmatprep.subr.mxu0 0.0
  %2231 = vmatpush1.msra.mxu0 0.0
  %2232 = vmatprep.subr.mxu0 0.0
  %2233 = vmatpush1.msra.mxu0 0.0
  %2234 = vmatprep.subr.mxu0 0.0
  %2235 = vmatpush1.msra.mxu0 0.0
  %2236 = vmatprep.subr.mxu0 0.0
  %2237 = vmatpush1.msra.mxu0 0.0
  %2238 = vmatprep.subr.mxu0 0.0
  %2239 = vmatpush1.msra.mxu0 0.0
  %2240 = vmatprep.subr.mxu0 0.0
  %2241 = vmatpush1.msra.mxu0 0.0
  %2242 = vmatprep.subr.mxu0 0.0
  %2243 = vmatpush1.msra.mxu0 0.0
  %2244 = vmatprep.subr.mxu0 0.0
  %2245 = vmatpush1.msra.mxu0 0.0
  %2246 = vmatprep.mubr.f32.mxu0 0.0
  %2247 = vmatmul.mubr.f32.gmra.mrb[0].mxu0 %v2180
  %v2248 = vpop.f32.mrb[0].mxu0
  %v2249 = vadd.f32 %v2177, %v2248
  %v2250 = vpop.f32.mrb[0].mxu0
  %2251 = vdwg.mxu0
  %v2252 = vtanh.pop %v2249
  %2253 = vst.msk [vmem:[%s12] sm:$0xff] %vm321, %v2252
  // Predicated region
  $region50: #{tpu_custom_call.1} parent=0 // pred_check
    _
  $region51: #{tpu_custom_call.1} parent=0 // pred_check_branch
    %2255 = sbr.rel (0) target = $region53
  $region52: #{tpu_custom_call.1} parent=0 // pred_region
    _
  $region53: #{tpu_custom_call.1} parent=0 // pred_fallthru
    _
  // Predicated region
  $region54: #{tpu_custom_call.1} parent=0 // pred_check
    _
  $region55: #{tpu_custom_call.1} parent=0 // pred_check_branch
    %2257 = sbr.rel (0) target = $region57
  $region56: #{tpu_custom_call.1} parent=0 // pred_region
    _
  $region57: #{tpu_custom_call.1} parent=0 // pred_fallthru
    _

</llo_original>
